<compile_context>
chip_gen: v5e
topology: v5e:2x2
jax: 0.10.0
libtpu: 0.0.40
codegen_flags: <defaults>
</compile_context>

<pallas_src>
import functools

import jax
import jax.numpy as jnp
import numpy as np
from jax import lax
from jax.experimental import pallas as pl
from jax.experimental.pallas import tpu as pltpu

# Conservative: v7x has 64 MiB VMEM per TC (vs 128 MiB on v5e/v6e); leave
# headroom for Mosaic internal scratch.
_VMEM_LIMIT_BYTES = 40 * 1024 * 1024
_SUBLANE = 8


def _round_up(x, m):
  return (x + m - 1) // m * m


# ---------------------------------------------------------------------------
# Conv-as-one-matmul weight (banded Toeplitz over width):
#   TW[dh*W*Cp + wi*Cp + ci, wo*Cp + co] = w[co, ci, dh, wi - wo + 1]
# (0 where the tap falls outside [0, 3)).  With an LHS row-slab
#   LHS[h, dh*W*Cp + wi*Cp + ci] = x[h + dh - 1, wi, ci]
# one MXU matmul LHS @ TW yields the padding=1 3x3 conv output row; width
# zero-padding is folded into the banded structure, height padding into the
# (zeroed) halo rows.
# ---------------------------------------------------------------------------
def _toeplitz_weight(w_oihw, width, cin_p, cout_p, dtype):
  cout, cin, kh, kw = w_oihw.shape
  assert kh == 3 and kw == 3
  wt = jnp.transpose(w_oihw.astype(jnp.float32), (2, 3, 1, 0))   # (3,3,Ci,Co)
  wi = jnp.arange(width)[:, None]
  wo = jnp.arange(width)[None, :]
  dw = wi - wo + 1                                               # (W, W)
  valid = ((dw >= 0) & (dw <= 2)).astype(jnp.float32)
  dwc = jnp.clip(dw, 0, 2)
  blk = wt[:, dwc] * valid[None, :, :, None, None]               # (3,W,W,Ci,Co)
  blk = jnp.transpose(blk, (0, 1, 3, 2, 4))                      # (3,W,Ci,W,Co)
  blk = jnp.pad(blk, ((0, 0), (0, 0), (0, cin_p - cin),
                      (0, 0), (0, cout_p - cout)))
  return blk.reshape(3 * width * cin_p, width * cout_p).astype(dtype)


# ---------------------------------------------------------------------------
# Kernels
# ---------------------------------------------------------------------------
def _conv_tail(slab, w_ref, y_ref, sum_ref, sq_ref, *, tile_h):
  # slab: (tile_h+2, W*Cp).  Single K = 3*W*Cp matmul on the MXU.
  lhs = jnp.concatenate(
      [slab[0:tile_h], slab[1:tile_h + 1], slab[2:tile_h + 2]], axis=1)
  acc = jnp.dot(lhs, w_ref[...], preferred_element_type=jnp.float32)
  y_ref[...] = acc.astype(y_ref.dtype)
  # Per-tile BN partial statistics (raw conv output, f32 accumulator).
  sum_ref[...] = jnp.sum(acc, axis=0, keepdims=True)
  sq_ref[...] = jnp.sum(acc * acc, axis=0, keepdims=True)


def _conv1_kernel(mid_ref, halo_ref, w_ref, y_ref, sum_ref, sq_ref, *, tile_h):
  # Halo rows are pre-zeroed at image boundaries (conv zero padding).
  slab = jnp.concatenate(
      [halo_ref[0:1, :], mid_ref[...], halo_ref[1:2, :]], axis=0)
  _conv_tail(slab, w_ref, y_ref, sum_ref, sq_ref, tile_h=tile_h)


def _conv2_kernel(mid_ref, halo_ref, s_ref, t_ref, w_ref,
                  y_ref, sum_ref, sq_ref, *, tile_h):
  # BN1 apply + ReLU fused into the conv2 prologue (no `mid` HBM round trip).
  s = s_ref[...]
  t = t_ref[...]

  def bn_relu(v):
    return jnp.maximum(v.astype(jnp.float32) * s + t, 0.0)

  ti = pl.program_id(1)
  nt = pl.num_programs(1)
  top = jnp.where(ti > 0, bn_relu(halo_ref[0:1, :]), 0.0)
  bot = jnp.where(ti < nt - 1, bn_relu(halo_ref[1:2, :]), 0.0)
  mid = bn_relu(mid_ref[...])
  slab = jnp.concatenate([top, mid, bot], axis=0).astype(w_ref.dtype)
  _conv_tail(slab, w_ref, y_ref, sum_ref, sq_ref, tile_h=tile_h)


def _bn2_residual_kernel(y_ref, x_ref, s_ref, t_ref, o_ref):
  y = y_ref[...].astype(jnp.float32)
  x = x_ref[...].astype(jnp.float32)
  o_ref[...] = jnp.maximum(y * s_ref[...] + t_ref[...] + x, 0.0).astype(o_ref.dtype)


# ---------------------------------------------------------------------------
# pallas_call wrappers
# ---------------------------------------------------------------------------
def _conv_block(mid, halo, tw, s=None, tshift=None, *, tile_h, out_dtype):
  n, h, wcp = mid.shape
  nt = h // tile_h
  wcout = tw.shape[1]

  row_in = pl.BlockSpec((None, tile_h, wcp), lambda b, i: (b, i, 0))
  halo_in = pl.BlockSpec((None, None, 2, wcp), lambda b, i: (b, i, 0, 0))
  w_in = pl.BlockSpec(tw.shape, lambda b, i: (0, 0))
  vec_in = pl.BlockSpec((1, wcp), lambda b, i: (0, 0))
  row_out = pl.BlockSpec((None, tile_h, wcout), lambda b, i: (b, i, 0))
  stat_out = pl.BlockSpec((None, None, 1, wcout), lambda b, i: (b, i, 0, 0))

  if s is None:
    kernel = functools.partial(_conv1_kernel, tile_h=tile_h)
    in_specs = [row_in, halo_in, w_in]
    args = (mid, halo, tw)
  else:
    kernel = functools.partial(_conv2_kernel, tile_h=tile_h)
    in_specs = [row_in, halo_in, vec_in, vec_in, w_in]
    args = (mid, halo, s, tshift, tw)

  flops = 2 * n * h * tw.shape[0] * wcout
  bytes_acc = sum(int(a.size) * jnp.dtype(a.dtype).itemsize for a in args)
  bytes_acc += n * h * wcout * jnp.dtype(out_dtype).itemsize
  bytes_acc += 2 * n * nt * wcout * 4

  return pl.pallas_call(
      kernel,
      grid=(n, nt),
      in_specs=in_specs,
      out_specs=(row_out, stat_out, stat_out),
      out_shape=(
          jax.ShapeDtypeStruct((n, h, wcout), out_dtype),
          jax.ShapeDtypeStruct((n, nt, 1, wcout), jnp.float32),
          jax.ShapeDtypeStruct((n, nt, 1, wcout), jnp.float32),
      ),
      compiler_params=pltpu.CompilerParams(
          dimension_semantics=("parallel", "parallel"),
          vmem_limit_bytes=_VMEM_LIMIT_BYTES),
      cost_estimate=pl.CostEstimate(flops=int(flops), transcendentals=0,
                                    bytes_accessed=int(bytes_acc)),
  )(*args)


def _bn2_residual(y2, x_packed, s, t, *, tile_h, out_dtype):
  n, h, wcp = y2.shape
  nt = h // tile_h
  row = pl.BlockSpec((None, tile_h, wcp), lambda b, i: (b, i, 0))
  vec = pl.BlockSpec((1, wcp), lambda b, i: (0, 0))
  bytes_acc = (y2.size * jnp.dtype(y2.dtype).itemsize
               + x_packed.size * jnp.dtype(x_packed.dtype).itemsize
               + n * h * wcp * jnp.dtype(out_dtype).itemsize)
  return pl.pallas_call(
      _bn2_residual_kernel,
      grid=(n, nt),
      in_specs=[row, row, vec, vec],
      out_specs=row,
      out_shape=jax.ShapeDtypeStruct((n, h, wcp), out_dtype),
      compiler_params=pltpu.CompilerParams(
          dimension_semantics=("parallel", "parallel"),
          vmem_limit_bytes=_VMEM_LIMIT_BYTES),
      cost_estimate=pl.CostEstimate(flops=int(4 * n * h * wcp),
                                    transcendentals=0,
                                    bytes_accessed=int(bytes_acc)),
  )(y2, x_packed, s, t)


# ---------------------------------------------------------------------------
# Small XLA glue (tiny gathers / reductions only; no slab materialization)
# ---------------------------------------------------------------------------
def _halo_rows(a, tile_h):
  # a: (N, H, W*Cp) -> (N, T, 2, W*Cp): the rows just above/below each row
  # tile, zeros at the image boundary (= conv zero padding).  2 rows per tile.
  n, h, wcp = a.shape
  nt = h // tile_h
  base = jnp.arange(nt) * tile_h

  def take(idx):
    v = a[:, jnp.clip(idx, 0, h - 1), :]                          # (N, T, WCp)
    ok = ((idx >= 0) & (idx <= h - 1)).astype(a.dtype)[None, :, None]
    return v * ok

  return jnp.stack([take(base - 1), take(base + tile_h)], axis=2)


def _fold_bn(ssum, ssq, gamma, beta, count, eps, width, c, cp):
  # ssum/ssq: (N, T, 1, W*Cp) partial sums of raw conv outputs, lanes = (w, c).
  tot = ssum.reshape(-1, width, cp)[..., :c].sum(axis=(0, 1))
  tot2 = ssq.reshape(-1, width, cp)[..., :c].sum(axis=(0, 1))
  mean = tot / count
  # TODO(synk): single-pass E[x^2]-E[x]^2 variance in f32; fine for unit-scale
  # activations, switch to a shifted/Welford combine if means get large.
  var = jnp.maximum(tot2 / count - mean * mean, 0.0)
  s = gamma.astype(jnp.float32) * lax.rsqrt(var + eps)
  t = beta.astype(jnp.float32) - mean * s
  s = jnp.tile(jnp.pad(s, (0, cp - c)), width).reshape(1, width * cp)
  t = jnp.tile(jnp.pad(t, (0, cp - c)), width).reshape(1, width * cp)
  return s, t


def _pick_tile_h(n, h, row_bytes):
  # tile_h must divide H and be a multiple of 8 (aligned (tile_h, W*Cp)
  # blocks) or equal H.  Prefer enough grid steps for pipelining / dual-TC
  # (>= 8, else >= 4), then the largest tile that fits a modest VMEM budget.
  budget = 8 * 1024 * 1024
  cands = [d for d in range(1, h + 1)
           if h % d == 0 and (d % _SUBLANE == 0 or d == h)]

  def key(th):
    g = n * (h // th)
    fits = 4 * (th + 2) * row_bytes <= budget   # double-buffered in+out rows
    return (fits, g >= 8, g >= 4, th)

  return max(cands, key=key)


def basic_block_forward(x_nchw, params, eps=1e-5, use_bf16=False):
  """BasicBlock(stride=1, downsample=None) forward. x_nchw: (N, C, H, W)."""
  w1, g1, b1, w2, g2, b2 = params
  n, c, h, w = x_nchw.shape
  cout = w1.shape[0]
  # TODO(synk): stride=1 / downsample=None path only (module defaults) => Cin == Cout.
  assert c == cout and w1.shape == (cout, c, 3, 3) and w2.shape == (cout, cout, 3, 3)

  cp = _round_up(c, _SUBLANE)
  wcp = w * cp
  cdt = jnp.bfloat16 if use_bf16 else jnp.float32
  count = n * h * w

  # NCHW -> (N, H, W*Cp): channels packed with width into the lane dim.
  xr = jnp.transpose(x_nchw.astype(jnp.float32), (0, 2, 3, 1))
  xr = jnp.pad(xr, ((0, 0), (0, 0), (0, 0), (0, cp - c)))
  x_packed = xr.reshape(n, h, wcp).astype(cdt)

  tile_h = _pick_tile_h(n, h, wcp * jnp.dtype(cdt).itemsize)

  tw1 = _toeplitz_weight(w1, w, cp, cp, cdt)
  tw2 = _toeplitz_weight(w2, w, cp, cp, cdt)

  # ---- conv1 + BN1 partial stats (BN1 itself is applied inside conv2) ----
  xh = _halo_rows(x_packed, tile_h)
  y1, s1sum, s1sq = _conv_block(x_packed, xh, tw1, tile_h=tile_h, out_dtype=cdt)
  s1, t1 = _fold_bn(s1sum, s1sq, g1, b1, count, eps, w, c, cp)

  # ---- relu(bn1(y1)) fused into conv2; conv2 + BN2 partial stats ----
  y1h = _halo_rows(y1, tile_h)
  y2, s2sum, s2sq = _conv_block(y1, y1h, tw2, s1, t1,
                                tile_h=tile_h, out_dtype=cdt)
  s2, t2 = _fold_bn(s2sum, s2sq, g2, b2, count, eps, w, c, cp)

  # ---- relu(bn2(y2) + identity), identity read directly from packed x ----
  out = _bn2_residual(y2, x_packed, s2, t2, tile_h=tile_h,
                      out_dtype=jnp.float32)

  out = out.reshape(n, h, w, cp)[:, :, :, :c]
  return jnp.transpose(out, (0, 3, 1, 2))                         # back to NCHW


# ---------------------------------------------------------------------------
# Pure-JAX reference (independent implementation, for verification)
# ---------------------------------------------------------------------------
def reference_forward(x_nchw, params, eps=1e-5):
  w1, g1, b1, w2, g2, b2 = params

  def conv(x, wt):
    return lax.conv_general_dilated(
        x, wt, window_strides=(1, 1), padding=[(1, 1), (1, 1)],
        dimension_numbers=("NCHW", "OIHW", "NCHW"))

  def bn(y, g, b):
    mean = jnp.mean(y, axis=(0, 2, 3), keepdims=True)
    var = jnp.mean((y - mean) ** 2, axis=(0, 2, 3), keepdims=True)
    return ((y - mean) / jnp.sqrt(var + eps) * g.reshape(1, -1, 1, 1)
            + b.reshape(1, -1, 1, 1))

  out = jax.nn.relu(bn(conv(x_nchw, w1), g1, b1))
  out = bn(conv(out, w2), g2, b2) + x_nchw
  return jax.nn.relu(out)


# ---------------------------------------------------------------------------
if __name__ == "__main__":
  N, C, H, W = 2, 4, 16, 16          # input_channels = num_channels = 4
  key = jax.random.PRNGKey(0)
  k_x, k_w1, k_w2, k_g1, k_b1, k_g2, k_b2 = jax.random.split(key, 7)

  x = jax.random.normal(k_x, (N, C, H, W), dtype=jnp.float32)
  w1 = jax.random.normal(k_w1, (C, C, 3, 3), dtype=jnp.float32) * 0.1
  w2 = jax.random.normal(k_w2, (C, C, 3, 3), dtype=jnp.float32) * 0.1
  g1 = 1.0 + 0.1 * jax.random.normal(k_g1, (C,), dtype=jnp.float32)
  b1 = 0.1 * jax.random.normal(k_b1, (C,), dtype=jnp.float32)
  g2 = 1.0 + 0.1 * jax.random.normal(k_g2, (C,), dtype=jnp.float32)
  b2 = 0.1 * jax.random.normal(k_b2, (C,), dtype=jnp.float32)
  params = (w1, g1, b1, w2, g2, b2)

  ref = jax.block_until_ready(reference_forward(x, params))

  # Exact (f32) path.
  fwd_f32 = jax.jit(functools.partial(basic_block_forward, use_bf16=False))
  out = jax.block_until_ready(fwd_f32(x, params))
  assert out.shape == (N, C, H, W) and out.dtype == jnp.float32
  np.testing.assert_allclose(np.asarray(out), np.asarray(ref), rtol=1e-4, atol=1e-4)

  # bf16 MXU / half-traffic path (recommended default on v6e/v7x).
  fwd_bf16 = jax.jit(functools.partial(basic_block_forward, use_bf16=True))
  out_bf = jax.block_until_ready(fwd_bf16(x, params))
  np.testing.assert_allclose(np.asarray(out_bf), np.asarray(ref), rtol=1e-1, atol=1e-1)

  print("KERNEL_OK")
</pallas_src>

<mosaic_0001>
module attributes {stable_mosaic.version = 11 : i64} {
  func.func @_conv1_kernel(%arg0: i32, %arg1: i32, %arg2: memref<1x8x128xf32, #tpu.memory_space<vmem>>, %arg3: memref<1x1x2x128xf32, #tpu.memory_space<vmem>>, %arg4: memref<384x128xf32, #tpu.memory_space<vmem>>, %arg5: memref<1x8x128xf32, #tpu.memory_space<vmem>>, %arg6: memref<1x1x1x128xf32, #tpu.memory_space<vmem>>, %arg7: memref<1x1x1x128xf32, #tpu.memory_space<vmem>>) attributes {dimension_semantics = [#tpu.dimension_semantics<parallel>, #tpu.dimension_semantics<parallel>], iteration_bounds = array<i64: 2, 2>, scalar_prefetch = 0 : i64, scratch_operands = 0 : i64, tpu.core_type = #tpu.core_type<tc>, window_params = [{transform_indices = @transform_0, window_bounds = array<i64: 1, 8, 128>}, {transform_indices = @transform_1, window_bounds = array<i64: 1, 1, 2, 128>}, {pipeline_mode = #tpu.pipeline_mode<synchronous>, transform_indices = @transform_2, window_bounds = array<i64: 384, 128>}, {transform_indices = @transform_3, window_bounds = array<i64: 1, 8, 128>}, {transform_indices = @transform_4, window_bounds = array<i64: 1, 1, 1, 128>}, {transform_indices = @transform_5, window_bounds = array<i64: 1, 1, 1, 128>}]} {
    %c0 = arith.constant 0 : index
    %c0_0 = arith.constant 0 : index
    %c0_1 = arith.constant 0 : index
    %c0_2 = arith.constant 0 : index
    %0 = vector.load %arg3[%c0, %c0_0, %c0_1, %c0_2] : memref<1x1x2x128xf32, #tpu.memory_space<vmem>>, vector<1x1x1x128xf32>
    %1 = vector.shape_cast %0 : vector<1x1x1x128xf32> to vector<1x128xf32>
    %c0_3 = arith.constant 0 : index
    %c0_4 = arith.constant 0 : index
    %c0_5 = arith.constant 0 : index
    %2 = vector.load %arg2[%c0_3, %c0_4, %c0_5] : memref<1x8x128xf32, #tpu.memory_space<vmem>>, vector<1x8x128xf32>
    %3 = vector.shape_cast %2 : vector<1x8x128xf32> to vector<8x128xf32>
    %c0_6 = arith.constant 0 : index
    %c0_7 = arith.constant 0 : index
    %c1 = arith.constant 1 : index
    %c0_8 = arith.constant 0 : index
    %4 = vector.load %arg3[%c0_6, %c0_7, %c1, %c0_8] : memref<1x1x2x128xf32, #tpu.memory_space<vmem>>, vector<1x1x1x128xf32>
    %5 = vector.shape_cast %4 : vector<1x1x1x128xf32> to vector<1x128xf32>
    %6 = tpu.concatenate %1, %3, %5 in 0 : vector<1x128xf32>, vector<8x128xf32>, vector<1x128xf32> -> vector<10x128xf32>
    %7 = vector.extract_strided_slice %6 {offsets = [0, 0], sizes = [8, 128], strides = [1, 1]} : vector<10x128xf32> to vector<8x128xf32>
    %8 = vector.extract_strided_slice %6 {offsets = [1, 0], sizes = [8, 128], strides = [1, 1]} : vector<10x128xf32> to vector<8x128xf32>
    %9 = vector.extract_strided_slice %6 {offsets = [2, 0], sizes = [8, 128], strides = [1, 1]} : vector<10x128xf32> to vector<8x128xf32>
    %10 = tpu.concatenate %7, %8, %9 in 1 : vector<8x128xf32>, vector<8x128xf32>, vector<8x128xf32> -> vector<8x384xf32>
    %c0_9 = arith.constant 0 : index
    %c0_10 = arith.constant 0 : index
    %11 = vector.load %arg4[%c0_9, %c0_10] : memref<384x128xf32, #tpu.memory_space<vmem>>, vector<384x128xf32>
    %cst = arith.constant dense<0.000000e+00> : vector<8x128xf32>
    %12 = tpu.matmul %10, %11, %cst {dimension_numbers = #tpu.dot_dimension_numbers<[1], [0], [0], [1], [0, 0, 1, 1], [], []>} : vector<8x384xf32>, vector<384x128xf32>, vector<8x128xf32> -> vector<8x128xf32>
    %c0_11 = arith.constant 0 : index
    %c0_12 = arith.constant 0 : index
    %c0_13 = arith.constant 0 : index
    %13 = vector.load %arg5[%c0_11, %c0_12, %c0_13] : memref<1x8x128xf32, #tpu.memory_space<vmem>>, vector<1x8x128xf32>
    %14 = vector.shape_cast %13 : vector<1x8x128xf32> to vector<8x128xf32>
    %15 = vector.shape_cast %12 : vector<8x128xf32> to vector<1x8x128xf32>
    tpu.vector_store %arg5[%c0_11, %c0_12, %c0_13], %15 {strides = array<i32>} : memref<1x8x128xf32, #tpu.memory_space<vmem>>, vector<1x8x128xf32>,
    %cst_14 = arith.constant dense<0.000000e+00> : vector<128xf32>
    %16 = vector.multi_reduction <add>, %12, %cst_14 [0] : vector<8x128xf32> to vector<128xf32>
    %17 = vector.shape_cast %16 : vector<128xf32> to vector<1x128xf32>
    %c0_15 = arith.constant 0 : index
    %c0_16 = arith.constant 0 : index
    %c0_17 = arith.constant 0 : index
    %c0_18 = arith.constant 0 : index
    %18 = vector.load %arg6[%c0_15, %c0_16, %c0_17, %c0_18] : memref<1x1x1x128xf32, #tpu.memory_space<vmem>>, vector<1x1x1x128xf32>
    %19 = vector.shape_cast %18 : vector<1x1x1x128xf32> to vector<1x128xf32>
    %20 = vector.shape_cast %17 : vector<1x128xf32> to vector<1x1x1x128xf32>
    tpu.vector_store %arg6[%c0_15, %c0_16, %c0_17, %c0_18], %20 {strides = array<i32>} : memref<1x1x1x128xf32, #tpu.memory_space<vmem>>, vector<1x1x1x128xf32>,
    %21 = arith.mulf %12, %12 : vector<8x128xf32>
    %cst_19 = arith.constant dense<0.000000e+00> : vector<128xf32>
    %22 = vector.multi_reduction <add>, %21, %cst_19 [0] : vector<8x128xf32> to vector<128xf32>
    %23 = vector.shape_cast %22 : vector<128xf32> to vector<1x128xf32>
    %c0_20 = arith.constant 0 : index
    %c0_21 = arith.constant 0 : index
    %c0_22 = arith.constant 0 : index
    %c0_23 = arith.constant 0 : index
    %24 = vector.load %arg7[%c0_20, %c0_21, %c0_22, %c0_23] : memref<1x1x1x128xf32, #tpu.memory_space<vmem>>, vector<1x1x1x128xf32>
    %25 = vector.shape_cast %24 : vector<1x1x1x128xf32> to vector<1x128xf32>
    %26 = vector.shape_cast %23 : vector<1x128xf32> to vector<1x1x1x128xf32>
    tpu.vector_store %arg7[%c0_20, %c0_21, %c0_22, %c0_23], %26 {strides = array<i32>} : memref<1x1x1x128xf32, #tpu.memory_space<vmem>>, vector<1x1x1x128xf32>,
    return
  }
  func.func @transform_0(%arg0: i32, %arg1: i32) -> (i32, i32, i32) {
    %c0_i32 = arith.constant 0 : i32
    %c0_i32_0 = arith.constant 0 : i32
    return %arg0, %arg1, %c0_i32 : i32, i32, i32
  }
  func.func @transform_1(%arg0: i32, %arg1: i32) -> (i32, i32, i32, i32) {
    %c0_i32 = arith.constant 0 : i32
    %c0_i32_0 = arith.constant 0 : i32
    %c0_i32_1 = arith.constant 0 : i32
    return %arg0, %arg1, %c0_i32, %c0_i32_0 : i32, i32, i32, i32
  }
  func.func @transform_2(%arg0: i32, %arg1: i32) -> (i32, i32) {
    %c0_i32 = arith.constant 0 : i32
    %c0_i32_0 = arith.constant 0 : i32
    %c0_i32_1 = arith.constant 0 : i32
    return %c0_i32, %c0_i32_0 : i32, i32
  }
  func.func @transform_3(%arg0: i32, %arg1: i32) -> (i32, i32, i32) {
    %c0_i32 = arith.constant 0 : i32
    %c0_i32_0 = arith.constant 0 : i32
    return %arg0, %arg1, %c0_i32 : i32, i32, i32
  }
  func.func @transform_4(%arg0: i32, %arg1: i32) -> (i32, i32, i32, i32) {
    %c0_i32 = arith.constant 0 : i32
    %c0_i32_0 = arith.constant 0 : i32
    %c0_i32_1 = arith.constant 0 : i32
    return %arg0, %arg1, %c0_i32, %c0_i32_0 : i32, i32, i32, i32
  }
  func.func @transform_5(%arg0: i32, %arg1: i32) -> (i32, i32, i32, i32) {
    %c0_i32 = arith.constant 0 : i32
    %c0_i32_0 = arith.constant 0 : i32
    %c0_i32_1 = arith.constant 0 : i32
    return %arg0, %arg1, %c0_i32, %c0_i32_0 : i32, i32, i32, i32
  }
}

module attributes {stable_mosaic.version = 11 : i64} {
  func.func @_conv2_kernel(%arg0: i32, %arg1: i32, %arg2: memref<1x8x128xf32, #tpu.memory_space<vmem>>, %arg3: memref<1x1x2x128xf32, #tpu.memory_space<vmem>>, %arg4: memref<1x128xf32, #tpu.memory_space<vmem>>, %arg5: memref<1x128xf32, #tpu.memory_space<vmem>>, %arg6: memref<384x128xf32, #tpu.memory_space<vmem>>, %arg7: memref<1x8x128xf32, #tpu.memory_space<vmem>>, %arg8: memref<1x1x1x128xf32, #tpu.memory_space<vmem>>, %arg9: memref<1x1x1x128xf32, #tpu.memory_space<vmem>>) attributes {dimension_semantics = [#tpu.dimension_semantics<parallel>, #tpu.dimension_semantics<parallel>], iteration_bounds = array<i64: 2, 2>, scalar_prefetch = 0 : i64, scratch_operands = 0 : i64, tpu.core_type = #tpu.core_type<tc>, window_params = [{transform_indices = @transform_0, window_bounds = array<i64: 1, 8, 128>}, {transform_indices = @transform_1, window_bounds = array<i64: 1, 1, 2, 128>}, {pipeline_mode = #tpu.pipeline_mode<synchronous>, transform_indices = @transform_2, window_bounds = array<i64: 1, 128>}, {pipeline_mode = #tpu.pipeline_mode<synchronous>, transform_indices = @transform_3, window_bounds = array<i64: 1, 128>}, {pipeline_mode = #tpu.pipeline_mode<synchronous>, transform_indices = @transform_4, window_bounds = array<i64: 384, 128>}, {transform_indices = @transform_5, window_bounds = array<i64: 1, 8, 128>}, {transform_indices = @transform_6, window_bounds = array<i64: 1, 1, 1, 128>}, {transform_indices = @transform_7, window_bounds = array<i64: 1, 1, 1, 128>}]} {
    %c0 = arith.constant 0 : index
    %c0_0 = arith.constant 0 : index
    %0 = vector.load %arg4[%c0, %c0_0] : memref<1x128xf32, #tpu.memory_space<vmem>>, vector<1x128xf32>
    %c0_1 = arith.constant 0 : index
    %c0_2 = arith.constant 0 : index
    %1 = vector.load %arg5[%c0_1, %c0_2] : memref<1x128xf32, #tpu.memory_space<vmem>>, vector<1x128xf32>
    %c0_i32 = arith.constant 0 : i32
    %2 = arith.cmpi sgt, %arg1, %c0_i32 : i32
    %c0_3 = arith.constant 0 : index
    %c0_4 = arith.constant 0 : index
    %c0_5 = arith.constant 0 : index
    %c0_6 = arith.constant 0 : index
    %3 = vector.load %arg3[%c0_3, %c0_4, %c0_5, %c0_6] : memref<1x1x2x128xf32, #tpu.memory_space<vmem>>, vector<1x1x1x128xf32>
    %4 = vector.shape_cast %3 : vector<1x1x1x128xf32> to vector<1x128xf32>
    %5 = arith.mulf %4, %0 : vector<1x128xf32>
    %6 = arith.addf %5, %1 : vector<1x128xf32>
    %cst = arith.constant 0.000000e+00 : f32
    %7 = vector.broadcast %cst : f32 to vector<1x128xf32>
    %8 = arith.maximumf %6, %7 : vector<1x128xf32>
    %cst_7 = arith.constant 0.000000e+00 : f32
    %9 = vector.broadcast %cst_7 : f32 to vector<1x128xf32>
    %10 = arith.select %2, %8, %9 : vector<1x128xf32>
    %c1_i32 = arith.constant 1 : i32
    %11 = arith.cmpi slt, %arg1, %c1_i32 : i32
    %c0_8 = arith.constant 0 : index
    %c0_9 = arith.constant 0 : index
    %c1 = arith.constant 1 : index
    %c0_10 = arith.constant 0 : index
    %12 = vector.load %arg3[%c0_8, %c0_9, %c1, %c0_10] : memref<1x1x2x128xf32, #tpu.memory_space<vmem>>, vector<1x1x1x128xf32>
    %13 = vector.shape_cast %12 : vector<1x1x1x128xf32> to vector<1x128xf32>
    %14 = arith.mulf %13, %0 : vector<1x128xf32>
    %15 = arith.addf %14, %1 : vector<1x128xf32>
    %cst_11 = arith.constant 0.000000e+00 : f32
    %16 = vector.broadcast %cst_11 : f32 to vector<1x128xf32>
    %17 = arith.maximumf %15, %16 : vector<1x128xf32>
    %cst_12 = arith.constant 0.000000e+00 : f32
    %18 = vector.broadcast %cst_12 : f32 to vector<1x128xf32>
    %19 = arith.select %11, %17, %18 : vector<1x128xf32>
    %c0_13 = arith.constant 0 : index
    %c0_14 = arith.constant 0 : index
    %c0_15 = arith.constant 0 : index
    %20 = vector.load %arg2[%c0_13, %c0_14, %c0_15] : memref<1x8x128xf32, #tpu.memory_space<vmem>>, vector<1x8x128xf32>
    %21 = vector.shape_cast %20 : vector<1x8x128xf32> to vector<8x128xf32>
    %22 = vector.broadcast %0 : vector<1x128xf32> to vector<8x128xf32>
    %23 = arith.mulf %21, %22 : vector<8x128xf32>
    %24 = vector.broadcast %1 : vector<1x128xf32> to vector<8x128xf32>
    %25 = arith.addf %23, %24 : vector<8x128xf32>
    %cst_16 = arith.constant 0.000000e+00 : f32
    %26 = vector.broadcast %cst_16 : f32 to vector<8x128xf32>
    %27 = arith.maximumf %25, %26 : vector<8x128xf32>
    %28 = tpu.concatenate %10, %27, %19 in 0 : vector<1x128xf32>, vector<8x128xf32>, vector<1x128xf32> -> vector<10x128xf32>
    %29 = vector.extract_strided_slice %28 {offsets = [0, 0], sizes = [8, 128], strides = [1, 1]} : vector<10x128xf32> to vector<8x128xf32>
    %30 = vector.extract_strided_slice %28 {offsets = [1, 0], sizes = [8, 128], strides = [1, 1]} : vector<10x128xf32> to vector<8x128xf32>
    %31 = vector.extract_strided_slice %28 {offsets = [2, 0], sizes = [8, 128], strides = [1, 1]} : vector<10x128xf32> to vector<8x128xf32>
    %32 = tpu.concatenate %29, %30, %31 in 1 : vector<8x128xf32>, vector<8x128xf32>, vector<8x128xf32> -> vector<8x384xf32>
    %c0_17 = arith.constant 0 : index
    %c0_18 = arith.constant 0 : index
    %33 = vector.load %arg6[%c0_17, %c0_18] : memref<384x128xf32, #tpu.memory_space<vmem>>, vector<384x128xf32>
    %cst_19 = arith.constant dense<0.000000e+00> : vector<8x128xf32>
    %34 = tpu.matmul %32, %33, %cst_19 {dimension_numbers = #tpu.dot_dimension_numbers<[1], [0], [0], [1], [0, 0, 1, 1], [], []>} : vector<8x384xf32>, vector<384x128xf32>, vector<8x128xf32> -> vector<8x128xf32>
    %c0_20 = arith.constant 0 : index
    %c0_21 = arith.constant 0 : index
    %c0_22 = arith.constant 0 : index
    %35 = vector.load %arg7[%c0_20, %c0_21, %c0_22] : memref<1x8x128xf32, #tpu.memory_space<vmem>>, vector<1x8x128xf32>
    %36 = vector.shape_cast %35 : vector<1x8x128xf32> to vector<8x128xf32>
    %37 = vector.shape_cast %34 : vector<8x128xf32> to vector<1x8x128xf32>
    tpu.vector_store %arg7[%c0_20, %c0_21, %c0_22], %37 {strides = array<i32>} : memref<1x8x128xf32, #tpu.memory_space<vmem>>, vector<1x8x128xf32>,
    %cst_23 = arith.constant dense<0.000000e+00> : vector<128xf32>
    %38 = vector.multi_reduction <add>, %34, %cst_23 [0] : vector<8x128xf32> to vector<128xf32>
    %39 = vector.shape_cast %38 : vector<128xf32> to vector<1x128xf32>
    %c0_24 = arith.constant 0 : index
    %c0_25 = arith.constant 0 : index
    %c0_26 = arith.constant 0 : index
    %c0_27 = arith.constant 0 : index
    %40 = vector.load %arg8[%c0_24, %c0_25, %c0_26, %c0_27] : memref<1x1x1x128xf32, #tpu.memory_space<vmem>>, vector<1x1x1x128xf32>
    %41 = vector.shape_cast %40 : vector<1x1x1x128xf32> to vector<1x128xf32>
    %42 = vector.shape_cast %39 : vector<1x128xf32> to vector<1x1x1x128xf32>
    tpu.vector_store %arg8[%c0_24, %c0_25, %c0_26, %c0_27], %42 {strides = array<i32>} : memref<1x1x1x128xf32, #tpu.memory_space<vmem>>, vector<1x1x1x128xf32>,
    %43 = arith.mulf %34, %34 : vector<8x128xf32>
    %cst_28 = arith.constant dense<0.000000e+00> : vector<128xf32>
    %44 = vector.multi_reduction <add>, %43, %cst_28 [0] : vector<8x128xf32> to vector<128xf32>
    %45 = vector.shape_cast %44 : vector<128xf32> to vector<1x128xf32>
    %c0_29 = arith.constant 0 : index
    %c0_30 = arith.constant 0 : index
    %c0_31 = arith.constant 0 : index
    %c0_32 = arith.constant 0 : index
    %46 = vector.load %arg9[%c0_29, %c0_30, %c0_31, %c0_32] : memref<1x1x1x128xf32, #tpu.memory_space<vmem>>, vector<1x1x1x128xf32>
    %47 = vector.shape_cast %46 : vector<1x1x1x128xf32> to vector<1x128xf32>
    %48 = vector.shape_cast %45 : vector<1x128xf32> to vector<1x1x1x128xf32>
    tpu.vector_store %arg9[%c0_29, %c0_30, %c0_31, %c0_32], %48 {strides = array<i32>} : memref<1x1x1x128xf32, #tpu.memory_space<vmem>>, vector<1x1x1x128xf32>,
    return
  }
  func.func @transform_0(%arg0: i32, %arg1: i32) -> (i32, i32, i32) {
    %c0_i32 = arith.constant 0 : i32
    %c0_i32_0 = arith.constant 0 : i32
    return %arg0, %arg1, %c0_i32 : i32, i32, i32
  }
  func.func @transform_1(%arg0: i32, %arg1: i32) -> (i32, i32, i32, i32) {
    %c0_i32 = arith.constant 0 : i32
    %c0_i32_0 = arith.constant 0 : i32
    %c0_i32_1 = arith.constant 0 : i32
    return %arg0, %arg1, %c0_i32, %c0_i32_0 : i32, i32, i32, i32
  }
  func.func @transform_2(%arg0: i32, %arg1: i32) -> (i32, i32) {
    %c0_i32 = arith.constant 0 : i32
    %c0_i32_0 = arith.constant 0 : i32
    %c0_i32_1 = arith.constant 0 : i32
    return %c0_i32, %c0_i32_0 : i32, i32
  }
  func.func @transform_3(%arg0: i32, %arg1: i32) -> (i32, i32) {
    %c0_i32 = arith.constant 0 : i32
    %c0_i32_0 = arith.constant 0 : i32
    %c0_i32_1 = arith.constant 0 : i32
    return %c0_i32, %c0_i32_0 : i32, i32
  }
  func.func @transform_4(%arg0: i32, %arg1: i32) -> (i32, i32) {
    %c0_i32 = arith.constant 0 : i32
    %c0_i32_0 = arith.constant 0 : i32
    %c0_i32_1 = arith.constant 0 : i32
    return %c0_i32, %c0_i32_0 : i32, i32
  }
  func.func @transform_5(%arg0: i32, %arg1: i32) -> (i32, i32, i32) {
    %c0_i32 = arith.constant 0 : i32
    %c0_i32_0 = arith.constant 0 : i32
    return %arg0, %arg1, %c0_i32 : i32, i32, i32
  }
  func.func @transform_6(%arg0: i32, %arg1: i32) -> (i32, i32, i32, i32) {
    %c0_i32 = arith.constant 0 : i32
    %c0_i32_0 = arith.constant 0 : i32
    %c0_i32_1 = arith.constant 0 : i32
    return %arg0, %arg1, %c0_i32, %c0_i32_0 : i32, i32, i32, i32
  }
  func.func @transform_7(%arg0: i32, %arg1: i32) -> (i32, i32, i32, i32) {
    %c0_i32 = arith.constant 0 : i32
    %c0_i32_0 = arith.constant 0 : i32
    %c0_i32_1 = arith.constant 0 : i32
    return %arg0, %arg1, %c0_i32, %c0_i32_0 : i32, i32, i32, i32
  }
}

module attributes {stable_mosaic.version = 11 : i64} {
  func.func @_bn2_residual_kernel(%arg0: i32, %arg1: i32, %arg2: memref<1x8x128xf32, #tpu.memory_space<vmem>>, %arg3: memref<1x8x128xf32, #tpu.memory_space<vmem>>, %arg4: memref<1x128xf32, #tpu.memory_space<vmem>>, %arg5: memref<1x128xf32, #tpu.memory_space<vmem>>, %arg6: memref<1x8x128xf32, #tpu.memory_space<vmem>>) attributes {dimension_semantics = [#tpu.dimension_semantics<parallel>, #tpu.dimension_semantics<parallel>], iteration_bounds = array<i64: 2, 2>, scalar_prefetch = 0 : i64, scratch_operands = 0 : i64, tpu.core_type = #tpu.core_type<tc>, window_params = [{transform_indices = @transform_0, window_bounds = array<i64: 1, 8, 128>}, {transform_indices = @transform_1, window_bounds = array<i64: 1, 8, 128>}, {pipeline_mode = #tpu.pipeline_mode<synchronous>, transform_indices = @transform_2, window_bounds = array<i64: 1, 128>}, {pipeline_mode = #tpu.pipeline_mode<synchronous>, transform_indices = @transform_3, window_bounds = array<i64: 1, 128>}, {transform_indices = @transform_4, window_bounds = array<i64: 1, 8, 128>}]} {
    %c0 = arith.constant 0 : index
    %c0_0 = arith.constant 0 : index
    %c0_1 = arith.constant 0 : index
    %0 = vector.load %arg2[%c0, %c0_0, %c0_1] : memref<1x8x128xf32, #tpu.memory_space<vmem>>, vector<1x8x128xf32>
    %1 = vector.shape_cast %0 : vector<1x8x128xf32> to vector<8x128xf32>
    %c0_2 = arith.constant 0 : index
    %c0_3 = arith.constant 0 : index
    %c0_4 = arith.constant 0 : index
    %2 = vector.load %arg3[%c0_2, %c0_3, %c0_4] : memref<1x8x128xf32, #tpu.memory_space<vmem>>, vector<1x8x128xf32>
    %3 = vector.shape_cast %2 : vector<1x8x128xf32> to vector<8x128xf32>
    %c0_5 = arith.constant 0 : index
    %c0_6 = arith.constant 0 : index
    %4 = vector.load %arg4[%c0_5, %c0_6] : memref<1x128xf32, #tpu.memory_space<vmem>>, vector<1x128xf32>
    %5 = vector.broadcast %4 : vector<1x128xf32> to vector<8x128xf32>
    %6 = arith.mulf %1, %5 : vector<8x128xf32>
    %c0_7 = arith.constant 0 : index
    %c0_8 = arith.constant 0 : index
    %7 = vector.load %arg5[%c0_7, %c0_8] : memref<1x128xf32, #tpu.memory_space<vmem>>, vector<1x128xf32>
    %8 = vector.broadcast %7 : vector<1x128xf32> to vector<8x128xf32>
    %9 = arith.addf %6, %8 : vector<8x128xf32>
    %10 = arith.addf %9, %3 : vector<8x128xf32>
    %cst = arith.constant 0.000000e+00 : f32
    %11 = vector.broadcast %cst : f32 to vector<8x128xf32>
    %12 = arith.maximumf %10, %11 : vector<8x128xf32>
    %c0_9 = arith.constant 0 : index
    %c0_10 = arith.constant 0 : index
    %c0_11 = arith.constant 0 : index
    %13 = vector.load %arg6[%c0_9, %c0_10, %c0_11] : memref<1x8x128xf32, #tpu.memory_space<vmem>>, vector<1x8x128xf32>
    %14 = vector.shape_cast %13 : vector<1x8x128xf32> to vector<8x128xf32>
    %15 = vector.shape_cast %12 : vector<8x128xf32> to vector<1x8x128xf32>
    tpu.vector_store %arg6[%c0_9, %c0_10, %c0_11], %15 {strides = array<i32>} : memref<1x8x128xf32, #tpu.memory_space<vmem>>, vector<1x8x128xf32>,
    return
  }
  func.func @transform_0(%arg0: i32, %arg1: i32) -> (i32, i32, i32) {
    %c0_i32 = arith.constant 0 : i32
    %c0_i32_0 = arith.constant 0 : i32
    return %arg0, %arg1, %c0_i32 : i32, i32, i32
  }
  func.func @transform_1(%arg0: i32, %arg1: i32) -> (i32, i32, i32) {
    %c0_i32 = arith.constant 0 : i32
    %c0_i32_0 = arith.constant 0 : i32
    return %arg0, %arg1, %c0_i32 : i32, i32, i32
  }
  func.func @transform_2(%arg0: i32, %arg1: i32) -> (i32, i32) {
    %c0_i32 = arith.constant 0 : i32
    %c0_i32_0 = arith.constant 0 : i32
    %c0_i32_1 = arith.constant 0 : i32
    return %c0_i32, %c0_i32_0 : i32, i32
  }
  func.func @transform_3(%arg0: i32, %arg1: i32) -> (i32, i32) {
    %c0_i32 = arith.constant 0 : i32
    %c0_i32_0 = arith.constant 0 : i32
    %c0_i32_1 = arith.constant 0 : i32
    return %c0_i32, %c0_i32_0 : i32, i32
  }
  func.func @transform_4(%arg0: i32, %arg1: i32) -> (i32, i32, i32) {
    %c0_i32 = arith.constant 0 : i32
    %c0_i32_0 = arith.constant 0 : i32
    return %arg0, %arg1, %c0_i32 : i32, i32, i32
  }
}

</mosaic_0001>

<llo_original>
// kernel: basic_block_forward.3
$region0: #{basic_block_forward.3}
  #allocation0 [shape = 'u32[]', space=smem, size = 0x4, offset = 0x4, fixed_abs, tag = 'smem constant byte address 0x4 - core index']
  #allocation1 [shape = 'u32[72,128]{1,0:T(1,128)}', space=vmem, size = 0x9000, scoped, tag = 'internal scratch']
  %s0 = inlined_call_operand.vmem [shape: f32[2,16,128], index: 0, kind: input, shape index: {}]
  %s1 = inlined_call_operand.vmem [shape: f32[2,2,2,128], index: 1, kind: input, shape index: {}]
  %s2 = inlined_call_operand.vmem [shape: f32[384,128], index: 2, kind: input, shape index: {}]
  %s3 = inlined_call_operand.vmem [shape: f32[2,16,128], index: 3, kind: output, shape index: {0}]
  %s4 = inlined_call_operand.vmem [shape: f32[2,2,1,128], index: 4, kind: output, shape index: {1}]
  %s5 = inlined_call_operand.vmem [shape: f32[2,2,1,128], index: 5, kind: output, shape index: {2}]
  %6 = xla_tuple %s3, %s4, %s5
  %s7 = sld [smem:[#allocation0]]
  $region61: #{basic_block_forward.3} parent=0
    _
  %s9 = ssub.s32 1, %s7
  %s10 = scalar_select 0, %s9, %s7
  loop: start=0, step=1, limit=6
  $region2: #{basic_block_forward.3} parent=0 // loop_pre_header
    _
  $region3: #{basic_block_forward.3} parent=0 // loop_header
    %s12 = sphi 0, %s16
    %p13 = scmp.ge.s32.totalorder %s12, 6
    %s19 = sphi 0, %s31
    %s20 = sphi 0, %s27
    %s21 = sphi 0, %s19
    %s22 = sphi 0, %s20
    %s23 = sphi 0, %s21
    %s24 = sphi 0, %s22
    %s36 = sphi 0, %s38
    %s39 = sphi 0, %s36
    %s40 = sphi 0, %s39
    %s56 = sphi 0, %s40
    %s64 = sphi 0, %s66
    %s67 = sphi 0, %s64
    %s68 = sphi 0, %s67
    %s84 = sphi 0, %s68
    %s88 = sphi 0, %s88
    %s90 = sphi 0, %s88
    %s91 = sphi 0, %s90
    %s105 = sphi 0, %s91
    %s113 = sphi 0, %s115
    %s116 = sphi 0, %s113
    %s117 = sphi 0, %s116
    %s133 = sphi 0, %s117
    %s141 = sphi 0, %s143
    %s144 = sphi 0, %s141
    %s145 = sphi 0, %s144
    %s161 = sphi 0, %s145
    %s169 = sphi 0, %s171
    %s172 = sphi 0, %s169
    %s173 = sphi 0, %s172
    %s189 = sphi 0, %s173
  $region4: #{basic_block_forward.3} parent=0 // loop_header_branch
    %15 = sbr.rel (%p13) target = $region8
  $region5: #{basic_block_forward.3} parent=0 // loop_body
    %s17 = ssub.s32 %s12, 1
    %s18 = ssub.s32 %s12, 2
    %s25 = sadd.s32 1, %s20
    %p26 = scmp.ge.s32.totalorder %s25, 2
    %s27 = scalar_select %p26, 0, %s25
    %s28 = sadd.s32 1, %s19
    %s29 = scalar_select %p26, %s28, %s19
    %p30 = scmp.ge.s32.totalorder %s29, 2
    %s31 = scalar_select %p30, 0, %s29
    %s32 = ssub.s32 %s19, %s31
    %s33 = ssub.s32 %s20, %s27
    %s34 = sor.u32 %s32, %s33
    %p35 = scmp.eq.s32.totalorder %s34, 0
    %s37 = sadd.s32 %s36, 1
    %s38 = scalar_select %p35, %s36, %s37
    %p41 = pneg %p35
    %p42 = scmp.eq.s32.totalorder %s12, 3
    %p43 = por %p41, %p42
    %p44 = scmp.ne.s32.totalorder %s36, %s39
    %p45 = scmp.eq.s32.totalorder %s12, 0
    %p46 = por %p44, %p45
    %p47 = scmp.ne.s32.totalorder %s36, %s39
    %p48 = scmp.eq.s32.totalorder %s17, 3
    %p49 = por %p47, %p48
    %p50 = scmp.ne.s32.totalorder %s39, %s40
    %p51 = scmp.eq.s32.totalorder %s17, 0
    %p52 = por %p50, %p51
    %p53 = scmp.ne.s32.totalorder %s39, %s40
    %p54 = scmp.eq.s32.totalorder %s18, 3
    %p55 = por %p53, %p54
    %p57 = scmp.ne.s32.totalorder %s40, %s56
    %p58 = scmp.eq.s32.totalorder %s18, 0
    %p59 = por %p57, %p58
    %s60 = ssub.s32 %s19, %s31
    %s61 = ssub.s32 %s20, %s27
    %s62 = sor.u32 %s60, %s61
    %p63 = scmp.eq.s32.totalorder %s62, 0
    %s65 = sadd.s32 %s64, 1
    %s66 = scalar_select %p63, %s64, %s65
    %p69 = pneg %p63
    %p70 = scmp.eq.s32.totalorder %s12, 3
    %p71 = por %p69, %p70
    %p72 = scmp.ne.s32.totalorder %s64, %s67
    %p73 = scmp.eq.s32.totalorder %s12, 0
    %p74 = por %p72, %p73
    %p75 = scmp.ne.s32.totalorder %s64, %s67
    %p76 = scmp.eq.s32.totalorder %s17, 3
    %p77 = por %p75, %p76
    %p78 = scmp.ne.s32.totalorder %s67, %s68
    %p79 = scmp.eq.s32.totalorder %s17, 0
    %p80 = por %p78, %p79
    %p81 = scmp.ne.s32.totalorder %s67, %s68
    %p82 = scmp.eq.s32.totalorder %s18, 3
    %p83 = por %p81, %p82
    %p85 = scmp.ne.s32.totalorder %s68, %s84
    %p86 = scmp.eq.s32.totalorder %s18, 0
    %p87 = por %p85, %p86
    %s89 = sadd.s32 %s88, 1
    %p92 = scmp.eq.s32.totalorder %s12, 3
    %p93 = scmp.ne.s32.totalorder %s88, %s90
    %p94 = scmp.eq.s32.totalorder %s12, 0
    %p95 = por %p93, %p94
    %p96 = scmp.ne.s32.totalorder %s88, %s90
    %p97 = scmp.eq.s32.totalorder %s17, 3
    %p98 = por %p96, %p97
    %p99 = scmp.ne.s32.totalorder %s90, %s91
    %p100 = scmp.eq.s32.totalorder %s17, 0
    %p101 = por %p99, %p100
    %p102 = scmp.ne.s32.totalorder %s90, %s91
    %p103 = scmp.eq.s32.totalorder %s18, 3
    %p104 = por %p102, %p103
    %p106 = scmp.ne.s32.totalorder %s91, %s105
    %p107 = scmp.eq.s32.totalorder %s18, 0
    %p108 = por %p106, %p107
    %s109 = ssub.s32 %s19, %s31
    %s110 = ssub.s32 %s20, %s27
    %s111 = sor.u32 %s109, %s110
    %p112 = scmp.eq.s32.totalorder %s111, 0
    %s114 = sadd.s32 %s113, 1
    %s115 = scalar_select %p112, %s113, %s114
    %p118 = pneg %p112
    %p119 = scmp.eq.s32.totalorder %s12, 3
    %p120 = por %p118, %p119
    %p121 = scmp.ne.s32.totalorder %s113, %s116
    %p122 = scmp.eq.s32.totalorder %s12, 0
    %p123 = por %p121, %p122
    %p124 = scmp.ne.s32.totalorder %s113, %s116
    %p125 = scmp.eq.s32.totalorder %s17, 3
    %p126 = por %p124, %p125
    %p127 = scmp.ne.s32.totalorder %s116, %s117
    %p128 = scmp.eq.s32.totalorder %s17, 0
    %p129 = por %p127, %p128
    %p130 = scmp.ne.s32.totalorder %s116, %s117
    %p131 = scmp.eq.s32.totalorder %s18, 3
    %p132 = por %p130, %p131
    %p134 = scmp.ne.s32.totalorder %s117, %s133
    %p135 = scmp.eq.s32.totalorder %s18, 0
    %p136 = por %p134, %p135
    %s137 = ssub.s32 %s19, %s31
    %s138 = ssub.s32 %s20, %s27
    %s139 = sor.u32 %s137, %s138
    %p140 = scmp.eq.s32.totalorder %s139, 0
    %s142 = sadd.s32 %s141, 1
    %s143 = scalar_select %p140, %s141, %s142
    %p146 = pneg %p140
    %p147 = scmp.eq.s32.totalorder %s12, 3
    %p148 = por %p146, %p147
    %p149 = scmp.ne.s32.totalorder %s141, %s144
    %p150 = scmp.eq.s32.totalorder %s12, 0
    %p151 = por %p149, %p150
    %p152 = scmp.ne.s32.totalorder %s141, %s144
    %p153 = scmp.eq.s32.totalorder %s17, 3
    %p154 = por %p152, %p153
    %p155 = scmp.ne.s32.totalorder %s144, %s145
    %p156 = scmp.eq.s32.totalorder %s17, 0
    %p157 = por %p155, %p156
    %p158 = scmp.ne.s32.totalorder %s144, %s145
    %p159 = scmp.eq.s32.totalorder %s18, 3
    %p160 = por %p158, %p159
    %p162 = scmp.ne.s32.totalorder %s145, %s161
    %p163 = scmp.eq.s32.totalorder %s18, 0
    %p164 = por %p162, %p163
    %s165 = ssub.s32 %s19, %s31
    %s166 = ssub.s32 %s20, %s27
    %s167 = sor.u32 %s165, %s166
    %p168 = scmp.eq.s32.totalorder %s167, 0
    %s170 = sadd.s32 %s169, 1
    %s171 = scalar_select %p168, %s169, %s170
    %p174 = pneg %p168
    %p175 = scmp.eq.s32.totalorder %s12, 3
    %p176 = por %p174, %p175
    %p177 = scmp.ne.s32.totalorder %s169, %s172
    %p178 = scmp.eq.s32.totalorder %s12, 0
    %p179 = por %p177, %p178
    %p180 = scmp.ne.s32.totalorder %s169, %s172
    %p181 = scmp.eq.s32.totalorder %s17, 3
    %p182 = por %p180, %p181
    %p183 = scmp.ne.s32.totalorder %s172, %s173
    %p184 = scmp.eq.s32.totalorder %s17, 0
    %p185 = por %p183, %p184
    %p186 = scmp.ne.s32.totalorder %s172, %s173
    %p187 = scmp.eq.s32.totalorder %s18, 3
    %p188 = por %p186, %p187
    %p190 = scmp.ne.s32.totalorder %s173, %s189
    %p191 = scmp.eq.s32.totalorder %s18, 0
    %p192 = por %p190, %p191
    %p193 = scmp.le.s32.totalorder 1, %s12
    %p194 = scmp.lt.s32.totalorder %s12, 5
    %p195 = pnand %p193, %p194
    %p196 = pneg %p195
    // Predicated region
    $region9: #{basic_block_forward.3} parent=5 // pred_check
      _
    $region10: #{basic_block_forward.3} parent=5 // pred_check_branch
      %198 = sbr.rel (%p195) target = $region12
    $region11: #{basic_block_forward.3} parent=5 // pred_region
      %s199 = ssub.s32 %s12, 1
      // Predicated region
      $region13: #{basic_block_forward.3} parent=11 // pred_check
        %p200 = pneg %p101
      $region14: #{basic_block_forward.3} parent=11 // pred_check_branch
        %202 = sbr.rel (%p200) target = $region16
      $region15: #{basic_block_forward.3} parent=11 // pred_region
        _
      $region16: #{basic_block_forward.3} parent=11 // pred_fallthru
        _
    $region12: #{basic_block_forward.3} parent=5 // pred_fallthru
      _
    %p203 = scmp.lt.s32.totalorder %s12, 4
    // Predicated region
    $region17: #{basic_block_forward.3} parent=5 // pred_check
      %p204 = pneg %p203
    $region18: #{basic_block_forward.3} parent=5 // pred_check_branch
      %206 = sbr.rel (%p204) target = $region20
    $region19: #{basic_block_forward.3} parent=5 // pred_region
      // Predicated region
      $region21: #{basic_block_forward.3} parent=19 // pred_check
        %p207 = pneg %p46
      $region22: #{basic_block_forward.3} parent=19 // pred_check_branch
        %209 = sbr.rel (%p207) target = $region24
      $region23: #{basic_block_forward.3} parent=19 // pred_region
        %p210 = scmp.lt.s32.totalorder %s19, 1
        %s211 = scalar_select %p210, %s19, 1
        %p212 = scmp.lt.s32.totalorder %s20, 1
        %s213 = scalar_select %p212, %s20, 1
        %s214 = smul.addr %s211, 2
        %s215 = sadd.s32 %s213, %s214
        %s216 = smul.addr %s215, 8
        %s217 = scalar_lea.vmem %s0, %s216
      $region24: #{basic_block_forward.3} parent=19 // pred_fallthru
        _
      // Predicated region
      $region25: #{basic_block_forward.3} parent=19 // pred_check
        %p218 = pneg %p74
      $region26: #{basic_block_forward.3} parent=19 // pred_check_branch
        %220 = sbr.rel (%p218) target = $region28
      $region27: #{basic_block_forward.3} parent=19 // pred_region
        %p221 = scmp.lt.s32.totalorder %s19, 1
        %s222 = scalar_select %p221, %s19, 1
        %p223 = scmp.lt.s32.totalorder %s20, 1
        %s224 = scalar_select %p223, %s20, 1
        %s225 = smul.addr %s222, 2
        %s226 = sadd.s32 %s224, %s225
        %s227 = smul.addr %s226, 2
        %s228 = scalar_lea.vmem %s1, %s227
      $region28: #{basic_block_forward.3} parent=19 // pred_fallthru
        _
    $region20: #{basic_block_forward.3} parent=5 // pred_fallthru
      _
    %p229 = scmp.le.s32.totalorder 1, %s12
    %p230 = scmp.lt.s32.totalorder %s12, 5
    %p231 = pnand %p229, %p230
    %p232 = pneg %p231
    // Predicated region
    $region29: #{basic_block_forward.3} parent=5 // pred_check
      _
    $region30: #{basic_block_forward.3} parent=5 // pred_check_branch
      %234 = sbr.rel (%p231) target = $region32
    $region31: #{basic_block_forward.3} parent=5 // pred_region
      %s235 = ssub.s32 %s12, 1
      %p236 = scmp.lt.s32.totalorder %s21, 1
      %s237 = scalar_select %p236, %s21, 1
      %p238 = scmp.lt.s32.totalorder %s22, 1
      %s239 = scalar_select %p238, %s22, 1
      %s240 = smul.addr %s237, 2
      %s241 = sadd.s32 %s239, %s240
      %s242 = smul.addr %s241, 8
      %s243 = scalar_lea.vmem %s0, %s242
      %p244 = pneg %p52
      %p245 = pneg %p49
      %p246 = scmp.lt.s32.totalorder %s21, 1
      %s247 = scalar_select %p246, %s21, 1
      %p248 = scmp.lt.s32.totalorder %s22, 1
      %s249 = scalar_select %p248, %s22, 1
      %s250 = smul.addr %s247, 2
      %s251 = sadd.s32 %s249, %s250
      %s252 = smul.addr %s251, 2
      %s253 = scalar_lea.vmem %s1, %s252
      %p254 = pneg %p80
      %p255 = pneg %p77
      %p256 = pneg %p101
      %p257 = pneg %p98
      %p258 = pneg %p129
      %p259 = pneg %p126
      %p260 = scmp.lt.s32.totalorder %s21, 1
      %s261 = scalar_select %p260, %s21, 1
      %p262 = scmp.lt.s32.totalorder %s22, 1
      %s263 = scalar_select %p262, %s22, 1
      %s264 = smul.addr %s261, 2
      %s265 = sadd.s32 %s263, %s264
      %s266 = smul.addr %s265, 8
      %s267 = scalar_lea.vmem %s3, %s266
      %p268 = pneg %p157
      %p269 = pneg %p154
      %p270 = scmp.lt.s32.totalorder %s21, 1
      %s271 = scalar_select %p270, %s21, 1
      %p272 = scmp.lt.s32.totalorder %s22, 1
      %s273 = scalar_select %p272, %s22, 1
      %s274 = smul.addr %s271, 2
      %s275 = sadd.s32 %s273, %s274
      %s276 = scalar_lea.vmem %s4, %s275
      %p277 = pneg %p185
      %p278 = pneg %p182
      %p279 = scmp.lt.s32.totalorder %s21, 1
      %s280 = scalar_select %p279, %s21, 1
      %p281 = scmp.lt.s32.totalorder %s22, 1
      %s282 = scalar_select %p281, %s22, 1
      %s283 = smul.addr %s280, 2
      %s284 = sadd.s32 %s282, %s283
      %s285 = scalar_lea.vmem %s5, %s284
      %p286 = scmp.lt.s32.totalorder %s21, 1
      %s287 = scalar_select %p286, %s21, 1
      %p288 = scmp.lt.s32.totalorder %s22, 1
      %s289 = scalar_select %p288, %s22, 1
      %s290 = smul.addr %s287, 2
      %s291 = sadd.s32 %s289, %s290
      %s292 = smul.addr %s291, 8
      %s293 = scalar_lea.vmem %s0, %s292
      %p294 = scmp.lt.s32.totalorder %s21, 1
      %s295 = scalar_select %p294, %s21, 1
      %p296 = scmp.lt.s32.totalorder %s22, 1
      %s297 = scalar_select %p296, %s22, 1
      %s298 = smul.addr %s295, 2
      %s299 = sadd.s32 %s297, %s298
      %s300 = smul.addr %s299, 2
      %s301 = scalar_lea.vmem %s1, %s300
      %p302 = scmp.lt.s32.totalorder %s21, 1
      %s303 = scalar_select %p302, %s21, 1
      %p304 = scmp.lt.s32.totalorder %s22, 1
      %s305 = scalar_select %p304, %s22, 1
      %s306 = smul.addr %s303, 2
      %s307 = sadd.s32 %s305, %s306
      %s308 = smul.addr %s307, 8
      %s309 = scalar_lea.vmem %s3, %s308
      %p310 = scmp.lt.s32.totalorder %s21, 1
      %s311 = scalar_select %p310, %s21, 1
      %p312 = scmp.lt.s32.totalorder %s22, 1
      %s313 = scalar_select %p312, %s22, 1
      %s314 = smul.addr %s311, 2
      %s315 = sadd.s32 %s313, %s314
      %s316 = scalar_lea.vmem %s4, %s315
      %p317 = scmp.lt.s32.totalorder %s21, 1
      %s318 = scalar_select %p317, %s21, 1
      %p319 = scmp.lt.s32.totalorder %s22, 1
      %s320 = scalar_select %p319, %s22, 1
      %s321 = smul.addr %s318, 2
      %s322 = sadd.s32 %s320, %s321
      %s323 = scalar_lea.vmem %s5, %s322
      %v324 = vld [vmem:[%s301] sm:$0x1]
      %v325 = vld [vmem:[%s293] sm:$0xff]
      %v326 = vld [vmem:[%s301 + $0x1] sm:$0x1]
      %v328 = vrot.slane %v325, 7
      %v331 = vrot.slane %v326, 7
      %vm333 = vcmask 1040384
      %v334 = vsel %vm333, %v324, %v328
      %v335 = vsel %vm333, %v328, %v331
      %vm338 = vcmask 1046528
      %v339 = vrot.slane %v334, 1
      %v340 = vrot.slane %v335, 1
      %v341 = vsel %vm338, %v339, %v340
      %vm343 = vcmask 1045504
      %v344 = vrot.slane %v334, 2
      %v345 = vrot.slane %v335, 2
      %v346 = vsel %vm343, %v344, %v345
      %v348 = vld [vmem:[%s2] sm:$0xff]
      %v349 = vld [vmem:[%s2 + $0x8] sm:$0xff]
      %v350 = vld [vmem:[%s2 + $0x10] sm:$0xff]
      %v351 = vld [vmem:[%s2 + $0x18] sm:$0xff]
      %v352 = vld [vmem:[%s2 + $0x20] sm:$0xff]
      %v353 = vld [vmem:[%s2 + $0x28] sm:$0xff]
      %v354 = vld [vmem:[%s2 + $0x30] sm:$0xff]
      %v355 = vld [vmem:[%s2 + $0x38] sm:$0xff]
      %v356 = vld [vmem:[%s2 + $0x40] sm:$0xff]
      %v357 = vld [vmem:[%s2 + $0x48] sm:$0xff]
      %v358 = vld [vmem:[%s2 + $0x50] sm:$0xff]
      %v359 = vld [vmem:[%s2 + $0x58] sm:$0xff]
      %v360 = vld [vmem:[%s2 + $0x60] sm:$0xff]
      %v361 = vld [vmem:[%s2 + $0x68] sm:$0xff]
      %v362 = vld [vmem:[%s2 + $0x70] sm:$0xff]
      %v363 = vld [vmem:[%s2 + $0x78] sm:$0xff]
      %v364 = vld [vmem:[%s2 + $0x80] sm:$0xff]
      %v365 = vld [vmem:[%s2 + $0x88] sm:$0xff]
      %v366 = vld [vmem:[%s2 + $0x90] sm:$0xff]
      %v367 = vld [vmem:[%s2 + $0x98] sm:$0xff]
      %v368 = vld [vmem:[%s2 + $0xa0] sm:$0xff]
      %v369 = vld [vmem:[%s2 + $0xa8] sm:$0xff]
      %v370 = vld [vmem:[%s2 + $0xb0] sm:$0xff]
      %v371 = vld [vmem:[%s2 + $0xb8] sm:$0xff]
      %v372 = vld [vmem:[%s2 + $0xc0] sm:$0xff]
      %v373 = vld [vmem:[%s2 + $0xc8] sm:$0xff]
      %v374 = vld [vmem:[%s2 + $0xd0] sm:$0xff]
      %v375 = vld [vmem:[%s2 + $0xd8] sm:$0xff]
      %v376 = vld [vmem:[%s2 + $0xe0] sm:$0xff]
      %v377 = vld [vmem:[%s2 + $0xe8] sm:$0xff]
      %v378 = vld [vmem:[%s2 + $0xf0] sm:$0xff]
      %v379 = vld [vmem:[%s2 + $0xf8] sm:$0xff]
      %v380 = vld [vmem:[%s2 + $0x100] sm:$0xff]
      %v381 = vld [vmem:[%s2 + $0x108] sm:$0xff]
      %v382 = vld [vmem:[%s2 + $0x110] sm:$0xff]
      %v383 = vld [vmem:[%s2 + $0x118] sm:$0xff]
      %v384 = vld [vmem:[%s2 + $0x120] sm:$0xff]
      %v385 = vld [vmem:[%s2 + $0x128] sm:$0xff]
      %v386 = vld [vmem:[%s2 + $0x130] sm:$0xff]
      %v387 = vld [vmem:[%s2 + $0x138] sm:$0xff]
      %v388 = vld [vmem:[%s2 + $0x140] sm:$0xff]
      %v389 = vld [vmem:[%s2 + $0x148] sm:$0xff]
      %v390 = vld [vmem:[%s2 + $0x150] sm:$0xff]
      %v391 = vld [vmem:[%s2 + $0x158] sm:$0xff]
      %v392 = vld [vmem:[%s2 + $0x160] sm:$0xff]
      %v393 = vld [vmem:[%s2 + $0x168] sm:$0xff]
      %v394 = vld [vmem:[%s2 + $0x170] sm:$0xff]
      %v395 = vld [vmem:[%s2 + $0x178] sm:$0xff]
      %396 = vmatpush.msra.mxu0 %v363
      %397 = vmatpush.msra.mxu0 %v362
      %398 = vmatpush.msra.mxu0 %v361
      %399 = vmatpush.msra.mxu0 %v360
      %400 = vmatpush.msra.mxu0 %v359
      %401 = vmatpush.msra.mxu0 %v358
      %402 = vmatpush.msra.mxu0 %v357
      %403 = vmatpush.msra.mxu0 %v356
      %404 = vmatpush.msra.mxu0 %v355
      %405 = vmatpush.msra.mxu0 %v354
      %406 = vmatpush.msra.mxu0 %v353
      %407 = vmatpush.msra.mxu0 %v352
      %408 = vmatpush.msra.mxu0 %v351
      %409 = vmatpush.msra.mxu0 %v350
      %410 = vmatpush.msra.mxu0 %v349
      %411 = vmatpush.msra.mxu0 %v348
      %412 = vmatmul.f32.gmra.mxu0 %v334
      %v413 = vpop.f32.mrf.mxu0
      %v414 = vadd.f32 0.0, %v413
      %415 = vdwg.mxu0
      %416 = vmatpush.msra.mxu0 %v379
      %417 = vmatpush.msra.mxu0 %v378
      %418 = vmatpush.msra.mxu0 %v377
      %419 = vmatpush.msra.mxu0 %v376
      %420 = vmatpush.msra.mxu0 %v375
      %421 = vmatpush.msra.mxu0 %v374
      %422 = vmatpush.msra.mxu0 %v373
      %423 = vmatpush.msra.mxu0 %v372
      %424 = vmatpush.msra.mxu0 %v371
      %425 = vmatpush.msra.mxu0 %v370
      %426 = vmatpush.msra.mxu0 %v369
      %427 = vmatpush.msra.mxu0 %v368
      %428 = vmatpush.msra.mxu0 %v367
      %429 = vmatpush.msra.mxu0 %v366
      %430 = vmatpush.msra.mxu0 %v365
      %431 = vmatpush.msra.mxu0 %v364
      %432 = vmatmul.f32.gmra.mxu0 %v341
      %v433 = vpop.f32.mrf.mxu0
      %v434 = vadd.f32 %v414, %v433
      %435 = vdwg.mxu0
      %436 = vmatpush.msra.mxu0 %v395
      %437 = vmatpush.msra.mxu0 %v394
      %438 = vmatpush.msra.mxu0 %v393
      %439 = vmatpush.msra.mxu0 %v392
      %440 = vmatpush.msra.mxu0 %v391
      %441 = vmatpush.msra.mxu0 %v390
      %442 = vmatpush.msra.mxu0 %v389
      %443 = vmatpush.msra.mxu0 %v388
      %444 = vmatpush.msra.mxu0 %v387
      %445 = vmatpush.msra.mxu0 %v386
      %446 = vmatpush.msra.mxu0 %v385
      %447 = vmatpush.msra.mxu0 %v384
      %448 = vmatpush.msra.mxu0 %v383
      %449 = vmatpush.msra.mxu0 %v382
      %450 = vmatpush.msra.mxu0 %v381
      %451 = vmatpush.msra.mxu0 %v380
      %452 = vmatmul.f32.gmra.mxu0 %v346
      %v453 = vpop.f32.mrf.mxu0
      %v454 = vadd.f32 %v434, %v453
      %455 = vdwg.mxu0
      %456 = vst [vmem:[%s309] sm:$0xff] %v454
      %v457 = vrot.slane %v454, 4
      %v458 = vadd.f32 %v454, %v457
      %v459 = vrot.slane %v458, 2
      %v460 = vadd.f32 %v458, %v459
      %v461 = vrot.slane %v460, 1
      %v462 = vadd.f32 %v460, %v461
      %463 = vst [vmem:[%s316] sm:$0x1] %v462
      %v464 = vmul.f32 %v454, %v454
      %v465 = vrot.slane %v464, 4
      %v466 = vadd.f32 %v464, %v465
      %v467 = vrot.slane %v466, 2
      %v468 = vadd.f32 %v466, %v467
      %v469 = vrot.slane %v468, 1
      %v470 = vadd.f32 %v468, %v469
      %471 = vst [vmem:[%s323] sm:$0x1] %v470
      %p472 = scmp.lt.s32.totalorder %s21, 1
      %s473 = scalar_select %p472, %s21, 1
      %p474 = scmp.lt.s32.totalorder %s22, 1
      %s475 = scalar_select %p474, %s22, 1
      %s476 = smul.addr %s473, 2
      %s477 = sadd.s32 %s475, %s476
      %s478 = smul.addr %s477, 8
      %s479 = scalar_lea.vmem %s3, %s478
      %p480 = scmp.lt.s32.totalorder %s21, 1
      %s481 = scalar_select %p480, %s21, 1
      %p482 = scmp.lt.s32.totalorder %s22, 1
      %s483 = scalar_select %p482, %s22, 1
      %s484 = smul.addr %s481, 2
      %s485 = sadd.s32 %s483, %s484
      %s486 = scalar_lea.vmem %s4, %s485
      %p487 = scmp.lt.s32.totalorder %s21, 1
      %s488 = scalar_select %p487, %s21, 1
      %p489 = scmp.lt.s32.totalorder %s22, 1
      %s490 = scalar_select %p489, %s22, 1
      %s491 = smul.addr %s488, 2
      %s492 = sadd.s32 %s490, %s491
      %s493 = scalar_lea.vmem %s5, %s492
      // Predicated region
      $region33: #{basic_block_forward.3} parent=31 // pred_check
        %p494 = pneg %p126
      $region34: #{basic_block_forward.3} parent=31 // pred_check_branch
        %496 = sbr.rel (%p494) target = $region36
      $region35: #{basic_block_forward.3} parent=31 // pred_region
        _
      $region36: #{basic_block_forward.3} parent=31 // pred_fallthru
        _
      // Predicated region
      $region37: #{basic_block_forward.3} parent=31 // pred_check
        %p497 = pneg %p154
      $region38: #{basic_block_forward.3} parent=31 // pred_check_branch
        %499 = sbr.rel (%p497) target = $region40
      $region39: #{basic_block_forward.3} parent=31 // pred_region
        _
      $region40: #{basic_block_forward.3} parent=31 // pred_fallthru
        _
      // Predicated region
      $region41: #{basic_block_forward.3} parent=31 // pred_check
        %p500 = pneg %p182
      $region42: #{basic_block_forward.3} parent=31 // pred_check_branch
        %502 = sbr.rel (%p500) target = $region44
      $region43: #{basic_block_forward.3} parent=31 // pred_region
        _
      $region44: #{basic_block_forward.3} parent=31 // pred_fallthru
        _
    $region32: #{basic_block_forward.3} parent=5 // pred_fallthru
      _
    %p503 = scmp.le.s32.totalorder 2, %s12
    // Predicated region
    $region45: #{basic_block_forward.3} parent=5 // pred_check
      %p504 = pneg %p503
    $region46: #{basic_block_forward.3} parent=5 // pred_check_branch
      %506 = sbr.rel (%p504) target = $region48
    $region47: #{basic_block_forward.3} parent=5 // pred_region
      %s507 = ssub.s32 %s12, 2
      // Predicated region
      $region49: #{basic_block_forward.3} parent=47 // pred_check
        %p508 = pneg %p132
      $region50: #{basic_block_forward.3} parent=47 // pred_check_branch
        %510 = sbr.rel (%p508) target = $region52
      $region51: #{basic_block_forward.3} parent=47 // pred_region
        %p511 = scmp.lt.s32.totalorder %s23, 1
        %s512 = scalar_select %p511, %s23, 1
        %p513 = scmp.lt.s32.totalorder %s24, 1
        %s514 = scalar_select %p513, %s24, 1
        %s515 = smul.addr %s512, 2
        %s516 = sadd.s32 %s514, %s515
        %s517 = smul.addr %s516, 8
        %s518 = scalar_lea.vmem %s3, %s517
      $region52: #{basic_block_forward.3} parent=47 // pred_fallthru
        _
      // Predicated region
      $region53: #{basic_block_forward.3} parent=47 // pred_check
        %p519 = pneg %p160
      $region54: #{basic_block_forward.3} parent=47 // pred_check_branch
        %521 = sbr.rel (%p519) target = $region56
      $region55: #{basic_block_forward.3} parent=47 // pred_region
        %p522 = scmp.lt.s32.totalorder %s23, 1
        %s523 = scalar_select %p522, %s23, 1
        %p524 = scmp.lt.s32.totalorder %s24, 1
        %s525 = scalar_select %p524, %s24, 1
        %s526 = smul.addr %s523, 2
        %s527 = sadd.s32 %s525, %s526
        %s528 = scalar_lea.vmem %s4, %s527
      $region56: #{basic_block_forward.3} parent=47 // pred_fallthru
        _
      // Predicated region
      $region57: #{basic_block_forward.3} parent=47 // pred_check
        %p529 = pneg %p188
      $region58: #{basic_block_forward.3} parent=47 // pred_check_branch
        %531 = sbr.rel (%p529) target = $region60
      $region59: #{basic_block_forward.3} parent=47 // pred_region
        %p532 = scmp.lt.s32.totalorder %s23, 1
        %s533 = scalar_select %p532, %s23, 1
        %p534 = scmp.lt.s32.totalorder %s24, 1
        %s535 = scalar_select %p534, %s24, 1
        %s536 = smul.addr %s533, 2
        %s537 = sadd.s32 %s535, %s536
        %s538 = scalar_lea.vmem %s5, %s537
      $region60: #{basic_block_forward.3} parent=47 // pred_fallthru
        _
    $region48: #{basic_block_forward.3} parent=5 // pred_fallthru
      _
  $region6: #{basic_block_forward.3} parent=0 // loop_footer
    %s16 = sadd.s32 1, %s12
  $region7: #{basic_block_forward.3} parent=0 // loop_footer_branch
    %11 = sbr.rel target = $region3
  $region8: #{basic_block_forward.3} parent=0 // loop_exit
    _

// kernel: tile.23
$region0: #{tile.23}
  #allocation0 [shape = 's32[1]{0}', space=sflag, size = 0x4, scoped, tag = 'scoped memory for tile.23']
  %s0 = inlined_call_operand.vmem [shape: f32[8], index: 0, kind: input, shape index: {}]
  %s1 = inlined_call_operand.vmem [shape: f32[16,8], index: 1, kind: output, shape index: {}]
  // Predicated region
  $region2: #{tile.23} parent=0 // pred_check
    _
  $region3: #{tile.23} parent=0 // pred_check_branch
    %3 = sbr.rel (0) target = $region5
  $region4: #{tile.23} parent=0 // pred_region
    _
  $region5: #{tile.23} parent=0 // pred_fallthru
    _
  %v4 = vld [vmem:[%s0] ss:$0 sm:$0xff]
  %5 = vst [vmem:[%s1] sm:$0xff] %v4
  %s6 = scalar_lea.vmem %s1, 8
  %7 = vst [vmem:[%s6] sm:$0xff] %v4

// kernel: tile.24
$region0: #{tile.24}
  %s0 = inlined_call_operand.vmem [shape: f32[16,8], index: 0, kind: input, shape index: {}]
  %s1 = inlined_call_operand.vmem [shape: f32[1,128], index: 1, kind: output, shape index: {}]
  $region1: #{tile.24} parent=0
    #allocation0 [shape = 'u8[4096]{0}', space=vmem, size = 0x1000, scoped, tag = 'scoped mem for output reshape']
    %v2 = vld [vmem:[%s0] sm:$0x1]
    %vm3 = vcmask 64512
    %4 = vst.msk [vmem:[#allocation0] sm:$0x1] %vm3, %v2
    %s5 = scalar_lea.vmem %s0, 15
    %v6 = vld [vmem:[%s5] sm:$0x1]
    %7 = vrot.lane.b32.xlu0 %v6, 120
    %v8 = vpop.permute.xlu0 %7
    %vm9 = vcmask 1048512
    %10 = vst.msk [vmem:[#allocation0] sm:$0x1] %vm9, %v8
    %s11 = scalar_lea.vmem %s0, 14
    %v12 = vld [vmem:[%s11] sm:$0x1]
    %13 = vrot.lane.b32.xlu0 %v12, 112
    %v14 = vpop.permute.xlu0 %13
    %vm15 = vcmask 982912
    %16 = vst.msk [vmem:[#allocation0] sm:$0x1] %vm15, %v14
    %s17 = scalar_lea.vmem %s0, 13
    %v18 = vld [vmem:[%s17] sm:$0x1]
    %19 = vrot.lane.b32.xlu0 %v18, 104
    %v20 = vpop.permute.xlu0 %19
    %vm21 = vcmask 917312
    %22 = vst.msk [vmem:[#allocation0] sm:$0x1] %vm21, %v20
    %s23 = scalar_lea.vmem %s0, 12
    %v24 = vld [vmem:[%s23] sm:$0x1]
    %25 = vrot.lane.b32.xlu0 %v24, 96
    %v26 = vpop.permute.xlu0 %25
    %vm27 = vcmask 851712
    %28 = vst.msk [vmem:[#allocation0] sm:$0x1] %vm27, %v26
    %s29 = scalar_lea.vmem %s0, 11
    %v30 = vld [vmem:[%s29] sm:$0x1]
    %31 = vrot.lane.b32.xlu0 %v30, 88
    %v32 = vpop.permute.xlu0 %31
    %vm33 = vcmask 786112
    %34 = vst.msk [vmem:[#allocation0] sm:$0x1] %vm33, %v32
    %s35 = scalar_lea.vmem %s0, 10
    %v36 = vld [vmem:[%s35] sm:$0x1]
    %37 = vrot.lane.b32.xlu0 %v36, 80
    %v38 = vpop.permute.xlu0 %37
    %vm39 = vcmask 720512
    %40 = vst.msk [vmem:[#allocation0] sm:$0x1] %vm39, %v38
    %s41 = scalar_lea.vmem %s0, 9
    %v42 = vld [vmem:[%s41] sm:$0x1]
    %43 = vrot.lane.b32.xlu0 %v42, 72
    %v44 = vpop.permute.xlu0 %43
    %vm45 = vcmask 654912
    %46 = vst.msk [vmem:[#allocation0] sm:$0x1] %vm45, %v44
    %s47 = scalar_lea.vmem %s0, 8
    %v48 = vld [vmem:[%s47] sm:$0x1]
    %49 = vrot.lane.b32.xlu0 %v48, 64
    %v50 = vpop.permute.xlu0 %49
    %vm51 = vcmask 589312
    %52 = vst.msk [vmem:[#allocation0] sm:$0x1] %vm51, %v50
    %s53 = scalar_lea.vmem %s0, 7
    %v54 = vld [vmem:[%s53] sm:$0x1]
    %55 = vrot.lane.b32.xlu0 %v54, 56
    %v56 = vpop.permute.xlu0 %55
    %vm57 = vcmask 523712
    %58 = vst.msk [vmem:[#allocation0] sm:$0x1] %vm57, %v56
    %s59 = scalar_lea.vmem %s0, 6
    %v60 = vld [vmem:[%s59] sm:$0x1]
    %61 = vrot.lane.b32.xlu0 %v60, 48
    %v62 = vpop.permute.xlu0 %61
    %vm63 = vcmask 458112
    %64 = vst.msk [vmem:[#allocation0] sm:$0x1] %vm63, %v62
    %s65 = scalar_lea.vmem %s0, 5
    %v66 = vld [vmem:[%s65] sm:$0x1]
    %67 = vrot.lane.b32.xlu0 %v66, 40
    %v68 = vpop.permute.xlu0 %67
    %vm69 = vcmask 392512
    %70 = vst.msk [vmem:[#allocation0] sm:$0x1] %vm69, %v68
    %s71 = scalar_lea.vmem %s0, 4
    %v72 = vld [vmem:[%s71] sm:$0x1]
    %73 = vrot.lane.b32.xlu0 %v72, 32
    %v74 = vpop.permute.xlu0 %73
    %vm75 = vcmask 326912
    %76 = vst.msk [vmem:[#allocation0] sm:$0x1] %vm75, %v74
    %s77 = scalar_lea.vmem %s0, 3
    %v78 = vld [vmem:[%s77] sm:$0x1]
    %79 = vrot.lane.b32.xlu0 %v78, 24
    %v80 = vpop.permute.xlu0 %79
    %vm81 = vcmask 261312
    %82 = vst.msk [vmem:[#allocation0] sm:$0x1] %vm81, %v80
    %s83 = scalar_lea.vmem %s0, 2
    %v84 = vld [vmem:[%s83] sm:$0x1]
    %85 = vrot.lane.b32.xlu0 %v84, 16
    %v86 = vpop.permute.xlu0 %85
    %vm87 = vcmask 195712
    %88 = vst.msk [vmem:[#allocation0] sm:$0x1] %vm87, %v86
    %s89 = scalar_lea.vmem %s0, 1
    %v90 = vld [vmem:[%s89] sm:$0x1]
    %91 = vrot.lane.b32.xlu0 %v90, 8
    %v92 = vpop.permute.xlu0 %91
    %vm93 = vcmask 130112
    %94 = vst.msk [vmem:[#allocation0] sm:$0x1] %vm93, %v92
    %s96 = ssub.s32 2, 1
    %v97 = vld [vmem:[#allocation0] sm:%s96]
    %s99 = ssub.s32 2, 1
    %100 = vst [vmem:[%s1] sm:%s99] %v97

// kernel: basic_block_forward.4
$region0: #{basic_block_forward.4}
  #allocation0 [shape = 'u32[]', space=smem, size = 0x4, offset = 0x4, fixed_abs, tag = 'smem constant byte address 0x4 - core index']
  #allocation1 [shape = 'u32[72,128]{1,0:T(1,128)}', space=vmem, size = 0x9000, scoped, tag = 'internal scratch']
  %s0 = inlined_call_operand.vmem [shape: f32[2,16,128], index: 0, kind: input, shape index: {}]
  %s1 = inlined_call_operand.vmem [shape: f32[2,2,2,128], index: 1, kind: input, shape index: {}]
  %s2 = inlined_call_operand.vmem [shape: f32[1,128], index: 2, kind: input, shape index: {}]
  %s3 = inlined_call_operand.vmem [shape: f32[1,128], index: 3, kind: input, shape index: {}]
  %s4 = inlined_call_operand.vmem [shape: f32[384,128], index: 4, kind: input, shape index: {}]
  %s5 = inlined_call_operand.vmem [shape: f32[2,16,128], index: 5, kind: output, shape index: {0}]
  %s6 = inlined_call_operand.vmem [shape: f32[2,2,1,128], index: 6, kind: output, shape index: {1}]
  %s7 = inlined_call_operand.vmem [shape: f32[2,2,1,128], index: 7, kind: output, shape index: {2}]
  %8 = xla_tuple %s5, %s6, %s7
  %s9 = sld [smem:[#allocation0]]
  $region69: #{basic_block_forward.4} parent=0
    _
  %s11 = ssub.s32 1, %s9
  %s12 = scalar_select 0, %s11, %s9
  loop: start=0, step=1, limit=6
  $region2: #{basic_block_forward.4} parent=0 // loop_pre_header
    _
  $region3: #{basic_block_forward.4} parent=0 // loop_header
    %s14 = sphi 0, %s18
    %p15 = scmp.ge.s32.totalorder %s14, 6
    %s21 = sphi 0, %s33
    %s22 = sphi 0, %s29
    %s23 = sphi 0, %s21
    %s24 = sphi 0, %s22
    %s25 = sphi 0, %s23
    %s26 = sphi 0, %s24
    %s38 = sphi 0, %s40
    %s41 = sphi 0, %s38
    %s42 = sphi 0, %s41
    %s58 = sphi 0, %s42
    %s66 = sphi 0, %s68
    %s69 = sphi 0, %s66
    %s70 = sphi 0, %s69
    %s86 = sphi 0, %s70
    %s90 = sphi 0, %s90
    %s92 = sphi 0, %s90
    %s93 = sphi 0, %s92
    %s107 = sphi 0, %s93
    %s111 = sphi 0, %s111
    %s113 = sphi 0, %s111
    %s114 = sphi 0, %s113
    %s128 = sphi 0, %s114
    %s132 = sphi 0, %s132
    %s134 = sphi 0, %s132
    %s135 = sphi 0, %s134
    %s149 = sphi 0, %s135
    %s157 = sphi 0, %s159
    %s160 = sphi 0, %s157
    %s161 = sphi 0, %s160
    %s177 = sphi 0, %s161
    %s185 = sphi 0, %s187
    %s188 = sphi 0, %s185
    %s189 = sphi 0, %s188
    %s205 = sphi 0, %s189
    %s213 = sphi 0, %s215
    %s216 = sphi 0, %s213
    %s217 = sphi 0, %s216
    %s233 = sphi 0, %s217
  $region4: #{basic_block_forward.4} parent=0 // loop_header_branch
    %17 = sbr.rel (%p15) target = $region8
  $region5: #{basic_block_forward.4} parent=0 // loop_body
    %s19 = ssub.s32 %s14, 1
    %s20 = ssub.s32 %s14, 2
    %s27 = sadd.s32 1, %s22
    %p28 = scmp.ge.s32.totalorder %s27, 2
    %s29 = scalar_select %p28, 0, %s27
    %s30 = sadd.s32 1, %s21
    %s31 = scalar_select %p28, %s30, %s21
    %p32 = scmp.ge.s32.totalorder %s31, 2
    %s33 = scalar_select %p32, 0, %s31
    %s34 = ssub.s32 %s21, %s33
    %s35 = ssub.s32 %s22, %s29
    %s36 = sor.u32 %s34, %s35
    %p37 = scmp.eq.s32.totalorder %s36, 0
    %s39 = sadd.s32 %s38, 1
    %s40 = scalar_select %p37, %s38, %s39
    %p43 = pneg %p37
    %p44 = scmp.eq.s32.totalorder %s14, 3
    %p45 = por %p43, %p44
    %p46 = scmp.ne.s32.totalorder %s38, %s41
    %p47 = scmp.eq.s32.totalorder %s14, 0
    %p48 = por %p46, %p47
    %p49 = scmp.ne.s32.totalorder %s38, %s41
    %p50 = scmp.eq.s32.totalorder %s19, 3
    %p51 = por %p49, %p50
    %p52 = scmp.ne.s32.totalorder %s41, %s42
    %p53 = scmp.eq.s32.totalorder %s19, 0
    %p54 = por %p52, %p53
    %p55 = scmp.ne.s32.totalorder %s41, %s42
    %p56 = scmp.eq.s32.totalorder %s20, 3
    %p57 = por %p55, %p56
    %p59 = scmp.ne.s32.totalorder %s42, %s58
    %p60 = scmp.eq.s32.totalorder %s20, 0
    %p61 = por %p59, %p60
    %s62 = ssub.s32 %s21, %s33
    %s63 = ssub.s32 %s22, %s29
    %s64 = sor.u32 %s62, %s63
    %p65 = scmp.eq.s32.totalorder %s64, 0
    %s67 = sadd.s32 %s66, 1
    %s68 = scalar_select %p65, %s66, %s67
    %p71 = pneg %p65
    %p72 = scmp.eq.s32.totalorder %s14, 3
    %p73 = por %p71, %p72
    %p74 = scmp.ne.s32.totalorder %s66, %s69
    %p75 = scmp.eq.s32.totalorder %s14, 0
    %p76 = por %p74, %p75
    %p77 = scmp.ne.s32.totalorder %s66, %s69
    %p78 = scmp.eq.s32.totalorder %s19, 3
    %p79 = por %p77, %p78
    %p80 = scmp.ne.s32.totalorder %s69, %s70
    %p81 = scmp.eq.s32.totalorder %s19, 0
    %p82 = por %p80, %p81
    %p83 = scmp.ne.s32.totalorder %s69, %s70
    %p84 = scmp.eq.s32.totalorder %s20, 3
    %p85 = por %p83, %p84
    %p87 = scmp.ne.s32.totalorder %s70, %s86
    %p88 = scmp.eq.s32.totalorder %s20, 0
    %p89 = por %p87, %p88
    %s91 = sadd.s32 %s90, 1
    %p94 = scmp.eq.s32.totalorder %s14, 3
    %p95 = scmp.ne.s32.totalorder %s90, %s92
    %p96 = scmp.eq.s32.totalorder %s14, 0
    %p97 = por %p95, %p96
    %p98 = scmp.ne.s32.totalorder %s90, %s92
    %p99 = scmp.eq.s32.totalorder %s19, 3
    %p100 = por %p98, %p99
    %p101 = scmp.ne.s32.totalorder %s92, %s93
    %p102 = scmp.eq.s32.totalorder %s19, 0
    %p103 = por %p101, %p102
    %p104 = scmp.ne.s32.totalorder %s92, %s93
    %p105 = scmp.eq.s32.totalorder %s20, 3
    %p106 = por %p104, %p105
    %p108 = scmp.ne.s32.totalorder %s93, %s107
    %p109 = scmp.eq.s32.totalorder %s20, 0
    %p110 = por %p108, %p109
    %s112 = sadd.s32 %s111, 1
    %p115 = scmp.eq.s32.totalorder %s14, 3
    %p116 = scmp.ne.s32.totalorder %s111, %s113
    %p117 = scmp.eq.s32.totalorder %s14, 0
    %p118 = por %p116, %p117
    %p119 = scmp.ne.s32.totalorder %s111, %s113
    %p120 = scmp.eq.s32.totalorder %s19, 3
    %p121 = por %p119, %p120
    %p122 = scmp.ne.s32.totalorder %s113, %s114
    %p123 = scmp.eq.s32.totalorder %s19, 0
    %p124 = por %p122, %p123
    %p125 = scmp.ne.s32.totalorder %s113, %s114
    %p126 = scmp.eq.s32.totalorder %s20, 3
    %p127 = por %p125, %p126
    %p129 = scmp.ne.s32.totalorder %s114, %s128
    %p130 = scmp.eq.s32.totalorder %s20, 0
    %p131 = por %p129, %p130
    %s133 = sadd.s32 %s132, 1
    %p136 = scmp.eq.s32.totalorder %s14, 3
    %p137 = scmp.ne.s32.totalorder %s132, %s134
    %p138 = scmp.eq.s32.totalorder %s14, 0
    %p139 = por %p137, %p138
    %p140 = scmp.ne.s32.totalorder %s132, %s134
    %p141 = scmp.eq.s32.totalorder %s19, 3
    %p142 = por %p140, %p141
    %p143 = scmp.ne.s32.totalorder %s134, %s135
    %p144 = scmp.eq.s32.totalorder %s19, 0
    %p145 = por %p143, %p144
    %p146 = scmp.ne.s32.totalorder %s134, %s135
    %p147 = scmp.eq.s32.totalorder %s20, 3
    %p148 = por %p146, %p147
    %p150 = scmp.ne.s32.totalorder %s135, %s149
    %p151 = scmp.eq.s32.totalorder %s20, 0
    %p152 = por %p150, %p151
    %s153 = ssub.s32 %s21, %s33
    %s154 = ssub.s32 %s22, %s29
    %s155 = sor.u32 %s153, %s154
    %p156 = scmp.eq.s32.totalorder %s155, 0
    %s158 = sadd.s32 %s157, 1
    %s159 = scalar_select %p156, %s157, %s158
    %p162 = pneg %p156
    %p163 = scmp.eq.s32.totalorder %s14, 3
    %p164 = por %p162, %p163
    %p165 = scmp.ne.s32.totalorder %s157, %s160
    %p166 = scmp.eq.s32.totalorder %s14, 0
    %p167 = por %p165, %p166
    %p168 = scmp.ne.s32.totalorder %s157, %s160
    %p169 = scmp.eq.s32.totalorder %s19, 3
    %p170 = por %p168, %p169
    %p171 = scmp.ne.s32.totalorder %s160, %s161
    %p172 = scmp.eq.s32.totalorder %s19, 0
    %p173 = por %p171, %p172
    %p174 = scmp.ne.s32.totalorder %s160, %s161
    %p175 = scmp.eq.s32.totalorder %s20, 3
    %p176 = por %p174, %p175
    %p178 = scmp.ne.s32.totalorder %s161, %s177
    %p179 = scmp.eq.s32.totalorder %s20, 0
    %p180 = por %p178, %p179
    %s181 = ssub.s32 %s21, %s33
    %s182 = ssub.s32 %s22, %s29
    %s183 = sor.u32 %s181, %s182
    %p184 = scmp.eq.s32.totalorder %s183, 0
    %s186 = sadd.s32 %s185, 1
    %s187 = scalar_select %p184, %s185, %s186
    %p190 = pneg %p184
    %p191 = scmp.eq.s32.totalorder %s14, 3
    %p192 = por %p190, %p191
    %p193 = scmp.ne.s32.totalorder %s185, %s188
    %p194 = scmp.eq.s32.totalorder %s14, 0
    %p195 = por %p193, %p194
    %p196 = scmp.ne.s32.totalorder %s185, %s188
    %p197 = scmp.eq.s32.totalorder %s19, 3
    %p198 = por %p196, %p197
    %p199 = scmp.ne.s32.totalorder %s188, %s189
    %p200 = scmp.eq.s32.totalorder %s19, 0
    %p201 = por %p199, %p200
    %p202 = scmp.ne.s32.totalorder %s188, %s189
    %p203 = scmp.eq.s32.totalorder %s20, 3
    %p204 = por %p202, %p203
    %p206 = scmp.ne.s32.totalorder %s189, %s205
    %p207 = scmp.eq.s32.totalorder %s20, 0
    %p208 = por %p206, %p207
    %s209 = ssub.s32 %s21, %s33
    %s210 = ssub.s32 %s22, %s29
    %s211 = sor.u32 %s209, %s210
    %p212 = scmp.eq.s32.totalorder %s211, 0
    %s214 = sadd.s32 %s213, 1
    %s215 = scalar_select %p212, %s213, %s214
    %p218 = pneg %p212
    %p219 = scmp.eq.s32.totalorder %s14, 3
    %p220 = por %p218, %p219
    %p221 = scmp.ne.s32.totalorder %s213, %s216
    %p222 = scmp.eq.s32.totalorder %s14, 0
    %p223 = por %p221, %p222
    %p224 = scmp.ne.s32.totalorder %s213, %s216
    %p225 = scmp.eq.s32.totalorder %s19, 3
    %p226 = por %p224, %p225
    %p227 = scmp.ne.s32.totalorder %s216, %s217
    %p228 = scmp.eq.s32.totalorder %s19, 0
    %p229 = por %p227, %p228
    %p230 = scmp.ne.s32.totalorder %s216, %s217
    %p231 = scmp.eq.s32.totalorder %s20, 3
    %p232 = por %p230, %p231
    %p234 = scmp.ne.s32.totalorder %s217, %s233
    %p235 = scmp.eq.s32.totalorder %s20, 0
    %p236 = por %p234, %p235
    %p237 = scmp.le.s32.totalorder 1, %s14
    %p238 = scmp.lt.s32.totalorder %s14, 5
    %p239 = pnand %p237, %p238
    %p240 = pneg %p239
    // Predicated region
    $region9: #{basic_block_forward.4} parent=5 // pred_check
      _
    $region10: #{basic_block_forward.4} parent=5 // pred_check_branch
      %242 = sbr.rel (%p239) target = $region12
    $region11: #{basic_block_forward.4} parent=5 // pred_region
      %s243 = ssub.s32 %s14, 1
      // Predicated region
      $region13: #{basic_block_forward.4} parent=11 // pred_check
        %p244 = pneg %p103
      $region14: #{basic_block_forward.4} parent=11 // pred_check_branch
        %246 = sbr.rel (%p244) target = $region16
      $region15: #{basic_block_forward.4} parent=11 // pred_region
        _
      $region16: #{basic_block_forward.4} parent=11 // pred_fallthru
        _
      // Predicated region
      $region17: #{basic_block_forward.4} parent=11 // pred_check
        %p247 = pneg %p124
      $region18: #{basic_block_forward.4} parent=11 // pred_check_branch
        %249 = sbr.rel (%p247) target = $region20
      $region19: #{basic_block_forward.4} parent=11 // pred_region
        _
      $region20: #{basic_block_forward.4} parent=11 // pred_fallthru
        _
      // Predicated region
      $region21: #{basic_block_forward.4} parent=11 // pred_check
        %p250 = pneg %p145
      $region22: #{basic_block_forward.4} parent=11 // pred_check_branch
        %252 = sbr.rel (%p250) target = $region24
      $region23: #{basic_block_forward.4} parent=11 // pred_region
        _
      $region24: #{basic_block_forward.4} parent=11 // pred_fallthru
        _
    $region12: #{basic_block_forward.4} parent=5 // pred_fallthru
      _
    %p253 = scmp.lt.s32.totalorder %s14, 4
    // Predicated region
    $region25: #{basic_block_forward.4} parent=5 // pred_check
      %p254 = pneg %p253
    $region26: #{basic_block_forward.4} parent=5 // pred_check_branch
      %256 = sbr.rel (%p254) target = $region28
    $region27: #{basic_block_forward.4} parent=5 // pred_region
      // Predicated region
      $region29: #{basic_block_forward.4} parent=27 // pred_check
        %p257 = pneg %p48
      $region30: #{basic_block_forward.4} parent=27 // pred_check_branch
        %259 = sbr.rel (%p257) target = $region32
      $region31: #{basic_block_forward.4} parent=27 // pred_region
        %p260 = scmp.lt.s32.totalorder %s21, 1
        %s261 = scalar_select %p260, %s21, 1
        %p262 = scmp.lt.s32.totalorder %s22, 1
        %s263 = scalar_select %p262, %s22, 1
        %s264 = smul.addr %s261, 2
        %s265 = sadd.s32 %s263, %s264
        %s266 = smul.addr %s265, 8
        %s267 = scalar_lea.vmem %s0, %s266
      $region32: #{basic_block_forward.4} parent=27 // pred_fallthru
        _
      // Predicated region
      $region33: #{basic_block_forward.4} parent=27 // pred_check
        %p268 = pneg %p76
      $region34: #{basic_block_forward.4} parent=27 // pred_check_branch
        %270 = sbr.rel (%p268) target = $region36
      $region35: #{basic_block_forward.4} parent=27 // pred_region
        %p271 = scmp.lt.s32.totalorder %s21, 1
        %s272 = scalar_select %p271, %s21, 1
        %p273 = scmp.lt.s32.totalorder %s22, 1
        %s274 = scalar_select %p273, %s22, 1
        %s275 = smul.addr %s272, 2
        %s276 = sadd.s32 %s274, %s275
        %s277 = smul.addr %s276, 2
        %s278 = scalar_lea.vmem %s1, %s277
      $region36: #{basic_block_forward.4} parent=27 // pred_fallthru
        _
    $region28: #{basic_block_forward.4} parent=5 // pred_fallthru
      _
    %p279 = scmp.le.s32.totalorder 1, %s14
    %p280 = scmp.lt.s32.totalorder %s14, 5
    %p281 = pnand %p279, %p280
    %p282 = pneg %p281
    // Predicated region
    $region37: #{basic_block_forward.4} parent=5 // pred_check
      _
    $region38: #{basic_block_forward.4} parent=5 // pred_check_branch
      %284 = sbr.rel (%p281) target = $region40
    $region39: #{basic_block_forward.4} parent=5 // pred_region
      %s285 = ssub.s32 %s14, 1
      %p286 = scmp.lt.s32.totalorder %s23, 1
      %s287 = scalar_select %p286, %s23, 1
      %p288 = scmp.lt.s32.totalorder %s24, 1
      %s289 = scalar_select %p288, %s24, 1
      %s290 = smul.addr %s287, 2
      %s291 = sadd.s32 %s289, %s290
      %s292 = smul.addr %s291, 8
      %s293 = scalar_lea.vmem %s0, %s292
      %p294 = pneg %p54
      %p295 = pneg %p51
      %p296 = scmp.lt.s32.totalorder %s23, 1
      %s297 = scalar_select %p296, %s23, 1
      %p298 = scmp.lt.s32.totalorder %s24, 1
      %s299 = scalar_select %p298, %s24, 1
      %s300 = smul.addr %s297, 2
      %s301 = sadd.s32 %s299, %s300
      %s302 = smul.addr %s301, 2
      %s303 = scalar_lea.vmem %s1, %s302
      %p304 = pneg %p82
      %p305 = pneg %p79
      %p306 = pneg %p103
      %p307 = pneg %p100
      %p308 = pneg %p124
      %p309 = pneg %p121
      %p310 = pneg %p145
      %p311 = pneg %p142
      %p312 = pneg %p173
      %p313 = pneg %p170
      %p314 = scmp.lt.s32.totalorder %s23, 1
      %s315 = scalar_select %p314, %s23, 1
      %p316 = scmp.lt.s32.totalorder %s24, 1
      %s317 = scalar_select %p316, %s24, 1
      %s318 = smul.addr %s315, 2
      %s319 = sadd.s32 %s317, %s318
      %s320 = smul.addr %s319, 8
      %s321 = scalar_lea.vmem %s5, %s320
      %p322 = pneg %p201
      %p323 = pneg %p198
      %p324 = scmp.lt.s32.totalorder %s23, 1
      %s325 = scalar_select %p324, %s23, 1
      %p326 = scmp.lt.s32.totalorder %s24, 1
      %s327 = scalar_select %p326, %s24, 1
      %s328 = smul.addr %s325, 2
      %s329 = sadd.s32 %s327, %s328
      %s330 = scalar_lea.vmem %s6, %s329
      %p331 = pneg %p229
      %p332 = pneg %p226
      %p333 = scmp.lt.s32.totalorder %s23, 1
      %s334 = scalar_select %p333, %s23, 1
      %p335 = scmp.lt.s32.totalorder %s24, 1
      %s336 = scalar_select %p335, %s24, 1
      %s337 = smul.addr %s334, 2
      %s338 = sadd.s32 %s336, %s337
      %s339 = scalar_lea.vmem %s7, %s338
      %p340 = scmp.lt.s32.totalorder %s23, 1
      %s341 = scalar_select %p340, %s23, 1
      %p342 = scmp.lt.s32.totalorder %s24, 1
      %s343 = scalar_select %p342, %s24, 1
      %s344 = smul.addr %s341, 2
      %s345 = sadd.s32 %s343, %s344
      %s346 = smul.addr %s345, 8
      %s347 = scalar_lea.vmem %s0, %s346
      %p348 = scmp.lt.s32.totalorder %s23, 1
      %s349 = scalar_select %p348, %s23, 1
      %p350 = scmp.lt.s32.totalorder %s24, 1
      %s351 = scalar_select %p350, %s24, 1
      %s352 = smul.addr %s349, 2
      %s353 = sadd.s32 %s351, %s352
      %s354 = smul.addr %s353, 2
      %s355 = scalar_lea.vmem %s1, %s354
      %p356 = scmp.lt.s32.totalorder %s23, 1
      %s357 = scalar_select %p356, %s23, 1
      %p358 = scmp.lt.s32.totalorder %s24, 1
      %s359 = scalar_select %p358, %s24, 1
      %s360 = smul.addr %s357, 2
      %s361 = sadd.s32 %s359, %s360
      %s362 = smul.addr %s361, 8
      %s363 = scalar_lea.vmem %s5, %s362
      %p364 = scmp.lt.s32.totalorder %s23, 1
      %s365 = scalar_select %p364, %s23, 1
      %p366 = scmp.lt.s32.totalorder %s24, 1
      %s367 = scalar_select %p366, %s24, 1
      %s368 = smul.addr %s365, 2
      %s369 = sadd.s32 %s367, %s368
      %s370 = scalar_lea.vmem %s6, %s369
      %p371 = scmp.lt.s32.totalorder %s23, 1
      %s372 = scalar_select %p371, %s23, 1
      %p373 = scmp.lt.s32.totalorder %s24, 1
      %s374 = scalar_select %p373, %s24, 1
      %s375 = smul.addr %s372, 2
      %s376 = sadd.s32 %s374, %s375
      %s377 = scalar_lea.vmem %s7, %s376
      %v378 = vld [vmem:[%s2] sm:$0x1]
      %v379 = vld [vmem:[%s3] sm:$0x1]
      %p380 = scmp.gt.s32.totalorder %s24, 0
      %v381 = vld [vmem:[%s355] sm:$0x1]
      %v382 = vmul.f32 %v381, %v378
      %v383 = vadd.f32 %v382, %v379
      %v384 = vmax.f32 %v383, 0.0
      %s385 = scalar_select %p380, 1, 0
      %v386 = vstv %s385
      %vm387 = vcmp.eq.s32.totalorder %v386, 1
      %v388 = vsel %vm387, %v384, 0.0
      %p389 = scmp.lt.s32.totalorder %s24, 1
      %v390 = vld [vmem:[%s355 + $0x1] sm:$0x1]
      %v391 = vmul.f32 %v390, %v378
      %v392 = vadd.f32 %v391, %v379
      %v393 = vmax.f32 %v392, 0.0
      %s394 = scalar_select %p389, 1, 0
      %v395 = vstv %s394
      %vm396 = vcmp.eq.s32.totalorder %v395, 1
      %v397 = vsel %vm396, %v393, 0.0
      %v398 = vld [vmem:[%s347] sm:$0xff]
      %v400 = vperm.slane %v378, 0
      %v402 = vmul.f32 %v398, %v400
      %v404 = vperm.slane %v379, 0
      %v406 = vadd.f32 %v402, %v404
      %v407 = vmax.f32 %v406, 0.0
      %v409 = vrot.slane %v407, 7
      %v412 = vrot.slane %v397, 7
      %vm414 = vcmask 1040384
      %v415 = vsel %vm414, %v388, %v409
      %v416 = vsel %vm414, %v409, %v412
      %vm419 = vcmask 1046528
      %v420 = vrot.slane %v415, 1
      %v421 = vrot.slane %v416, 1
      %v422 = vsel %vm419, %v420, %v421
      %vm424 = vcmask 1045504
      %v425 = vrot.slane %v415, 2
      %v426 = vrot.slane %v416, 2
      %v427 = vsel %vm424, %v425, %v426
      %v429 = vld [vmem:[%s4] sm:$0xff]
      %v430 = vld [vmem:[%s4 + $0x8] sm:$0xff]
      %v431 = vld [vmem:[%s4 + $0x10] sm:$0xff]
      %v432 = vld [vmem:[%s4 + $0x18] sm:$0xff]
      %v433 = vld [vmem:[%s4 + $0x20] sm:$0xff]
      %v434 = vld [vmem:[%s4 + $0x28] sm:$0xff]
      %v435 = vld [vmem:[%s4 + $0x30] sm:$0xff]
      %v436 = vld [vmem:[%s4 + $0x38] sm:$0xff]
      %v437 = vld [vmem:[%s4 + $0x40] sm:$0xff]
      %v438 = vld [vmem:[%s4 + $0x48] sm:$0xff]
      %v439 = vld [vmem:[%s4 + $0x50] sm:$0xff]
      %v440 = vld [vmem:[%s4 + $0x58] sm:$0xff]
      %v441 = vld [vmem:[%s4 + $0x60] sm:$0xff]
      %v442 = vld [vmem:[%s4 + $0x68] sm:$0xff]
      %v443 = vld [vmem:[%s4 + $0x70] sm:$0xff]
      %v444 = vld [vmem:[%s4 + $0x78] sm:$0xff]
      %v445 = vld [vmem:[%s4 + $0x80] sm:$0xff]
      %v446 = vld [vmem:[%s4 + $0x88] sm:$0xff]
      %v447 = vld [vmem:[%s4 + $0x90] sm:$0xff]
      %v448 = vld [vmem:[%s4 + $0x98] sm:$0xff]
      %v449 = vld [vmem:[%s4 + $0xa0] sm:$0xff]
      %v450 = vld [vmem:[%s4 + $0xa8] sm:$0xff]
      %v451 = vld [vmem:[%s4 + $0xb0] sm:$0xff]
      %v452 = vld [vmem:[%s4 + $0xb8] sm:$0xff]
      %v453 = vld [vmem:[%s4 + $0xc0] sm:$0xff]
      %v454 = vld [vmem:[%s4 + $0xc8] sm:$0xff]
      %v455 = vld [vmem:[%s4 + $0xd0] sm:$0xff]
      %v456 = vld [vmem:[%s4 + $0xd8] sm:$0xff]
      %v457 = vld [vmem:[%s4 + $0xe0] sm:$0xff]
      %v458 = vld [vmem:[%s4 + $0xe8] sm:$0xff]
      %v459 = vld [vmem:[%s4 + $0xf0] sm:$0xff]
      %v460 = vld [vmem:[%s4 + $0xf8] sm:$0xff]
      %v461 = vld [vmem:[%s4 + $0x100] sm:$0xff]
      %v462 = vld [vmem:[%s4 + $0x108] sm:$0xff]
      %v463 = vld [vmem:[%s4 + $0x110] sm:$0xff]
      %v464 = vld [vmem:[%s4 + $0x118] sm:$0xff]
      %v465 = vld [vmem:[%s4 + $0x120] sm:$0xff]
      %v466 = vld [vmem:[%s4 + $0x128] sm:$0xff]
      %v467 = vld [vmem:[%s4 + $0x130] sm:$0xff]
      %v468 = vld [vmem:[%s4 + $0x138] sm:$0xff]
      %v469 = vld [vmem:[%s4 + $0x140] sm:$0xff]
      %v470 = vld [vmem:[%s4 + $0x148] sm:$0xff]
      %v471 = vld [vmem:[%s4 + $0x150] sm:$0xff]
      %v472 = vld [vmem:[%s4 + $0x158] sm:$0xff]
      %v473 = vld [vmem:[%s4 + $0x160] sm:$0xff]
      %v474 = vld [vmem:[%s4 + $0x168] sm:$0xff]
      %v475 = vld [vmem:[%s4 + $0x170] sm:$0xff]
      %v476 = vld [vmem:[%s4 + $0x178] sm:$0xff]
      %477 = vmatpush.msra.mxu0 %v444
      %478 = vmatpush.msra.mxu0 %v443
      %479 = vmatpush.msra.mxu0 %v442
      %480 = vmatpush.msra.mxu0 %v441
      %481 = vmatpush.msra.mxu0 %v440
      %482 = vmatpush.msra.mxu0 %v439
      %483 = vmatpush.msra.mxu0 %v438
      %484 = vmatpush.msra.mxu0 %v437
      %485 = vmatpush.msra.mxu0 %v436
      %486 = vmatpush.msra.mxu0 %v435
      %487 = vmatpush.msra.mxu0 %v434
      %488 = vmatpush.msra.mxu0 %v433
      %489 = vmatpush.msra.mxu0 %v432
      %490 = vmatpush.msra.mxu0 %v431
      %491 = vmatpush.msra.mxu0 %v430
      %492 = vmatpush.msra.mxu0 %v429
      %493 = vmatmul.f32.gmra.mxu0 %v415
      %v494 = vpop.f32.mrf.mxu0
      %v495 = vadd.f32 0.0, %v494
      %496 = vdwg.mxu0
      %497 = vmatpush.msra.mxu0 %v460
      %498 = vmatpush.msra.mxu0 %v459
      %499 = vmatpush.msra.mxu0 %v458
      %500 = vmatpush.msra.mxu0 %v457
      %501 = vmatpush.msra.mxu0 %v456
      %502 = vmatpush.msra.mxu0 %v455
      %503 = vmatpush.msra.mxu0 %v454
      %504 = vmatpush.msra.mxu0 %v453
      %505 = vmatpush.msra.mxu0 %v452
      %506 = vmatpush.msra.mxu0 %v451
      %507 = vmatpush.msra.mxu0 %v450
      %508 = vmatpush.msra.mxu0 %v449
      %509 = vmatpush.msra.mxu0 %v448
      %510 = vmatpush.msra.mxu0 %v447
      %511 = vmatpush.msra.mxu0 %v446
      %512 = vmatpush.msra.mxu0 %v445
      %513 = vmatmul.f32.gmra.mxu0 %v422
      %v514 = vpop.f32.mrf.mxu0
      %v515 = vadd.f32 %v495, %v514
      %516 = vdwg.mxu0
      %517 = vmatpush.msra.mxu0 %v476
      %518 = vmatpush.msra.mxu0 %v475
      %519 = vmatpush.msra.mxu0 %v474
      %520 = vmatpush.msra.mxu0 %v473
      %521 = vmatpush.msra.mxu0 %v472
      %522 = vmatpush.msra.mxu0 %v471
      %523 = vmatpush.msra.mxu0 %v470
      %524 = vmatpush.msra.mxu0 %v469
      %525 = vmatpush.msra.mxu0 %v468
      %526 = vmatpush.msra.mxu0 %v467
      %527 = vmatpush.msra.mxu0 %v466
      %528 = vmatpush.msra.mxu0 %v465
      %529 = vmatpush.msra.mxu0 %v464
      %530 = vmatpush.msra.mxu0 %v463
      %531 = vmatpush.msra.mxu0 %v462
      %532 = vmatpush.msra.mxu0 %v461
      %533 = vmatmul.f32.gmra.mxu0 %v427
      %v534 = vpop.f32.mrf.mxu0
      %v535 = vadd.f32 %v515, %v534
      %536 = vdwg.mxu0
      %537 = vst [vmem:[%s363] sm:$0xff] %v535
      %v538 = vrot.slane %v535, 4
      %v539 = vadd.f32 %v535, %v538
      %v540 = vrot.slane %v539, 2
      %v541 = vadd.f32 %v539, %v540
      %v542 = vrot.slane %v541, 1
      %v543 = vadd.f32 %v541, %v542
      %544 = vst [vmem:[%s370] sm:$0x1] %v543
      %v545 = vmul.f32 %v535, %v535
      %v546 = vrot.slane %v545, 4
      %v547 = vadd.f32 %v545, %v546
      %v548 = vrot.slane %v547, 2
      %v549 = vadd.f32 %v547, %v548
      %v550 = vrot.slane %v549, 1
      %v551 = vadd.f32 %v549, %v550
      %552 = vst [vmem:[%s377] sm:$0x1] %v551
      %p553 = scmp.lt.s32.totalorder %s23, 1
      %s554 = scalar_select %p553, %s23, 1
      %p555 = scmp.lt.s32.totalorder %s24, 1
      %s556 = scalar_select %p555, %s24, 1
      %s557 = smul.addr %s554, 2
      %s558 = sadd.s32 %s556, %s557
      %s559 = smul.addr %s558, 8
      %s560 = scalar_lea.vmem %s5, %s559
      %p561 = scmp.lt.s32.totalorder %s23, 1
      %s562 = scalar_select %p561, %s23, 1
      %p563 = scmp.lt.s32.totalorder %s24, 1
      %s564 = scalar_select %p563, %s24, 1
      %s565 = smul.addr %s562, 2
      %s566 = sadd.s32 %s564, %s565
      %s567 = scalar_lea.vmem %s6, %s566
      %p568 = scmp.lt.s32.totalorder %s23, 1
      %s569 = scalar_select %p568, %s23, 1
      %p570 = scmp.lt.s32.totalorder %s24, 1
      %s571 = scalar_select %p570, %s24, 1
      %s572 = smul.addr %s569, 2
      %s573 = sadd.s32 %s571, %s572
      %s574 = scalar_lea.vmem %s7, %s573
      // Predicated region
      $region41: #{basic_block_forward.4} parent=39 // pred_check
        %p575 = pneg %p170
      $region42: #{basic_block_forward.4} parent=39 // pred_check_branch
        %577 = sbr.rel (%p575) target = $region44
      $region43: #{basic_block_forward.4} parent=39 // pred_region
        _
      $region44: #{basic_block_forward.4} parent=39 // pred_fallthru
        _
      // Predicated region
      $region45: #{basic_block_forward.4} parent=39 // pred_check
        %p578 = pneg %p198
      $region46: #{basic_block_forward.4} parent=39 // pred_check_branch
        %580 = sbr.rel (%p578) target = $region48
      $region47: #{basic_block_forward.4} parent=39 // pred_region
        _
      $region48: #{basic_block_forward.4} parent=39 // pred_fallthru
        _
      // Predicated region
      $region49: #{basic_block_forward.4} parent=39 // pred_check
        %p581 = pneg %p226
      $region50: #{basic_block_forward.4} parent=39 // pred_check_branch
        %583 = sbr.rel (%p581) target = $region52
      $region51: #{basic_block_forward.4} parent=39 // pred_region
        _
      $region52: #{basic_block_forward.4} parent=39 // pred_fallthru
        _
    $region40: #{basic_block_forward.4} parent=5 // pred_fallthru
      _
    %p584 = scmp.le.s32.totalorder 2, %s14
    // Predicated region
    $region53: #{basic_block_forward.4} parent=5 // pred_check
      %p585 = pneg %p584
    $region54: #{basic_block_forward.4} parent=5 // pred_check_branch
      %587 = sbr.rel (%p585) target = $region56
    $region55: #{basic_block_forward.4} parent=5 // pred_region
      %s588 = ssub.s32 %s14, 2
      // Predicated region
      $region57: #{basic_block_forward.4} parent=55 // pred_check
        %p589 = pneg %p176
      $region58: #{basic_block_forward.4} parent=55 // pred_check_branch
        %591 = sbr.rel (%p589) target = $region60
      $region59: #{basic_block_forward.4} parent=55 // pred_region
        %p592 = scmp.lt.s32.totalorder %s25, 1
        %s593 = scalar_select %p592, %s25, 1
        %p594 = scmp.lt.s32.totalorder %s26, 1
        %s595 = scalar_select %p594, %s26, 1
        %s596 = smul.addr %s593, 2
        %s597 = sadd.s32 %s595, %s596
        %s598 = smul.addr %s597, 8
        %s599 = scalar_lea.vmem %s5, %s598
      $region60: #{basic_block_forward.4} parent=55 // pred_fallthru
        _
      // Predicated region
      $region61: #{basic_block_forward.4} parent=55 // pred_check
        %p600 = pneg %p204
      $region62: #{basic_block_forward.4} parent=55 // pred_check_branch
        %602 = sbr.rel (%p600) target = $region64
      $region63: #{basic_block_forward.4} parent=55 // pred_region
        %p603 = scmp.lt.s32.totalorder %s25, 1
        %s604 = scalar_select %p603, %s25, 1
        %p605 = scmp.lt.s32.totalorder %s26, 1
        %s606 = scalar_select %p605, %s26, 1
        %s607 = smul.addr %s604, 2
        %s608 = sadd.s32 %s606, %s607
        %s609 = scalar_lea.vmem %s6, %s608
      $region64: #{basic_block_forward.4} parent=55 // pred_fallthru
        _
      // Predicated region
      $region65: #{basic_block_forward.4} parent=55 // pred_check
        %p610 = pneg %p232
      $region66: #{basic_block_forward.4} parent=55 // pred_check_branch
        %612 = sbr.rel (%p610) target = $region68
      $region67: #{basic_block_forward.4} parent=55 // pred_region
        %p613 = scmp.lt.s32.totalorder %s25, 1
        %s614 = scalar_select %p613, %s25, 1
        %p615 = scmp.lt.s32.totalorder %s26, 1
        %s616 = scalar_select %p615, %s26, 1
        %s617 = smul.addr %s614, 2
        %s618 = sadd.s32 %s616, %s617
        %s619 = scalar_lea.vmem %s7, %s618
      $region68: #{basic_block_forward.4} parent=55 // pred_fallthru
        _
    $region56: #{basic_block_forward.4} parent=5 // pred_fallthru
      _
  $region6: #{basic_block_forward.4} parent=0 // loop_footer
    %s18 = sadd.s32 1, %s14
  $region7: #{basic_block_forward.4} parent=0 // loop_footer_branch
    %13 = sbr.rel target = $region3
  $region8: #{basic_block_forward.4} parent=0 // loop_exit
    _

// kernel: basic_block_forward.5
$region0: #{basic_block_forward.5}
  #allocation0 [shape = 'u32[]', space=smem, size = 0x4, offset = 0x4, fixed_abs, tag = 'smem constant byte address 0x4 - core index']
  #allocation1 [shape = 'u32[72,128]{1,0:T(1,128)}', space=vmem, size = 0x9000, scoped, tag = 'internal scratch']
  %s0 = inlined_call_operand.vmem [shape: f32[2,16,128], index: 0, kind: input, shape index: {}]
  %s1 = inlined_call_operand.vmem [shape: f32[2,16,128], index: 1, kind: input, shape index: {}]
  %s2 = inlined_call_operand.vmem [shape: f32[1,128], index: 2, kind: input, shape index: {}]
  %s3 = inlined_call_operand.vmem [shape: f32[1,128], index: 3, kind: input, shape index: {}]
  %s4 = inlined_call_operand.vmem [shape: f32[2,16,128], index: 4, kind: output, shape index: {}]
  %s5 = sld [smem:[#allocation0]]
  $region49: #{basic_block_forward.5} parent=0
    _
  %s7 = ssub.s32 1, %s5
  %s8 = scalar_select 0, %s7, %s5
  loop: start=0, step=1, limit=6
  $region2: #{basic_block_forward.5} parent=0 // loop_pre_header
    _
  $region3: #{basic_block_forward.5} parent=0 // loop_header
    %s10 = sphi 0, %s14
    %p11 = scmp.ge.s32.totalorder %s10, 6
    %s17 = sphi 0, %s29
    %s18 = sphi 0, %s25
    %s19 = sphi 0, %s17
    %s20 = sphi 0, %s18
    %s21 = sphi 0, %s19
    %s22 = sphi 0, %s20
    %s34 = sphi 0, %s36
    %s37 = sphi 0, %s34
    %s38 = sphi 0, %s37
    %s54 = sphi 0, %s38
    %s62 = sphi 0, %s64
    %s65 = sphi 0, %s62
    %s66 = sphi 0, %s65
    %s82 = sphi 0, %s66
    %s86 = sphi 0, %s86
    %s88 = sphi 0, %s86
    %s89 = sphi 0, %s88
    %s103 = sphi 0, %s89
    %s107 = sphi 0, %s107
    %s109 = sphi 0, %s107
    %s110 = sphi 0, %s109
    %s124 = sphi 0, %s110
    %s132 = sphi 0, %s134
    %s135 = sphi 0, %s132
    %s136 = sphi 0, %s135
    %s152 = sphi 0, %s136
  $region4: #{basic_block_forward.5} parent=0 // loop_header_branch
    %13 = sbr.rel (%p11) target = $region8
  $region5: #{basic_block_forward.5} parent=0 // loop_body
    %s15 = ssub.s32 %s10, 1
    %s16 = ssub.s32 %s10, 2
    %s23 = sadd.s32 1, %s18
    %p24 = scmp.ge.s32.totalorder %s23, 2
    %s25 = scalar_select %p24, 0, %s23
    %s26 = sadd.s32 1, %s17
    %s27 = scalar_select %p24, %s26, %s17
    %p28 = scmp.ge.s32.totalorder %s27, 2
    %s29 = scalar_select %p28, 0, %s27
    %s30 = ssub.s32 %s17, %s29
    %s31 = ssub.s32 %s18, %s25
    %s32 = sor.u32 %s30, %s31
    %p33 = scmp.eq.s32.totalorder %s32, 0
    %s35 = sadd.s32 %s34, 1
    %s36 = scalar_select %p33, %s34, %s35
    %p39 = pneg %p33
    %p40 = scmp.eq.s32.totalorder %s10, 3
    %p41 = por %p39, %p40
    %p42 = scmp.ne.s32.totalorder %s34, %s37
    %p43 = scmp.eq.s32.totalorder %s10, 0
    %p44 = por %p42, %p43
    %p45 = scmp.ne.s32.totalorder %s34, %s37
    %p46 = scmp.eq.s32.totalorder %s15, 3
    %p47 = por %p45, %p46
    %p48 = scmp.ne.s32.totalorder %s37, %s38
    %p49 = scmp.eq.s32.totalorder %s15, 0
    %p50 = por %p48, %p49
    %p51 = scmp.ne.s32.totalorder %s37, %s38
    %p52 = scmp.eq.s32.totalorder %s16, 3
    %p53 = por %p51, %p52
    %p55 = scmp.ne.s32.totalorder %s38, %s54
    %p56 = scmp.eq.s32.totalorder %s16, 0
    %p57 = por %p55, %p56
    %s58 = ssub.s32 %s17, %s29
    %s59 = ssub.s32 %s18, %s25
    %s60 = sor.u32 %s58, %s59
    %p61 = scmp.eq.s32.totalorder %s60, 0
    %s63 = sadd.s32 %s62, 1
    %s64 = scalar_select %p61, %s62, %s63
    %p67 = pneg %p61
    %p68 = scmp.eq.s32.totalorder %s10, 3
    %p69 = por %p67, %p68
    %p70 = scmp.ne.s32.totalorder %s62, %s65
    %p71 = scmp.eq.s32.totalorder %s10, 0
    %p72 = por %p70, %p71
    %p73 = scmp.ne.s32.totalorder %s62, %s65
    %p74 = scmp.eq.s32.totalorder %s15, 3
    %p75 = por %p73, %p74
    %p76 = scmp.ne.s32.totalorder %s65, %s66
    %p77 = scmp.eq.s32.totalorder %s15, 0
    %p78 = por %p76, %p77
    %p79 = scmp.ne.s32.totalorder %s65, %s66
    %p80 = scmp.eq.s32.totalorder %s16, 3
    %p81 = por %p79, %p80
    %p83 = scmp.ne.s32.totalorder %s66, %s82
    %p84 = scmp.eq.s32.totalorder %s16, 0
    %p85 = por %p83, %p84
    %s87 = sadd.s32 %s86, 1
    %p90 = scmp.eq.s32.totalorder %s10, 3
    %p91 = scmp.ne.s32.totalorder %s86, %s88
    %p92 = scmp.eq.s32.totalorder %s10, 0
    %p93 = por %p91, %p92
    %p94 = scmp.ne.s32.totalorder %s86, %s88
    %p95 = scmp.eq.s32.totalorder %s15, 3
    %p96 = por %p94, %p95
    %p97 = scmp.ne.s32.totalorder %s88, %s89
    %p98 = scmp.eq.s32.totalorder %s15, 0
    %p99 = por %p97, %p98
    %p100 = scmp.ne.s32.totalorder %s88, %s89
    %p101 = scmp.eq.s32.totalorder %s16, 3
    %p102 = por %p100, %p101
    %p104 = scmp.ne.s32.totalorder %s89, %s103
    %p105 = scmp.eq.s32.totalorder %s16, 0
    %p106 = por %p104, %p105
    %s108 = sadd.s32 %s107, 1
    %p111 = scmp.eq.s32.totalorder %s10, 3
    %p112 = scmp.ne.s32.totalorder %s107, %s109
    %p113 = scmp.eq.s32.totalorder %s10, 0
    %p114 = por %p112, %p113
    %p115 = scmp.ne.s32.totalorder %s107, %s109
    %p116 = scmp.eq.s32.totalorder %s15, 3
    %p117 = por %p115, %p116
    %p118 = scmp.ne.s32.totalorder %s109, %s110
    %p119 = scmp.eq.s32.totalorder %s15, 0
    %p120 = por %p118, %p119
    %p121 = scmp.ne.s32.totalorder %s109, %s110
    %p122 = scmp.eq.s32.totalorder %s16, 3
    %p123 = por %p121, %p122
    %p125 = scmp.ne.s32.totalorder %s110, %s124
    %p126 = scmp.eq.s32.totalorder %s16, 0
    %p127 = por %p125, %p126
    %s128 = ssub.s32 %s17, %s29
    %s129 = ssub.s32 %s18, %s25
    %s130 = sor.u32 %s128, %s129
    %p131 = scmp.eq.s32.totalorder %s130, 0
    %s133 = sadd.s32 %s132, 1
    %s134 = scalar_select %p131, %s132, %s133
    %p137 = pneg %p131
    %p138 = scmp.eq.s32.totalorder %s10, 3
    %p139 = por %p137, %p138
    %p140 = scmp.ne.s32.totalorder %s132, %s135
    %p141 = scmp.eq.s32.totalorder %s10, 0
    %p142 = por %p140, %p141
    %p143 = scmp.ne.s32.totalorder %s132, %s135
    %p144 = scmp.eq.s32.totalorder %s15, 3
    %p145 = por %p143, %p144
    %p146 = scmp.ne.s32.totalorder %s135, %s136
    %p147 = scmp.eq.s32.totalorder %s15, 0
    %p148 = por %p146, %p147
    %p149 = scmp.ne.s32.totalorder %s135, %s136
    %p150 = scmp.eq.s32.totalorder %s16, 3
    %p151 = por %p149, %p150
    %p153 = scmp.ne.s32.totalorder %s136, %s152
    %p154 = scmp.eq.s32.totalorder %s16, 0
    %p155 = por %p153, %p154
    %p156 = scmp.le.s32.totalorder 1, %s10
    %p157 = scmp.lt.s32.totalorder %s10, 5
    %p158 = pnand %p156, %p157
    %p159 = pneg %p158
    // Predicated region
    $region9: #{basic_block_forward.5} parent=5 // pred_check
      _
    $region10: #{basic_block_forward.5} parent=5 // pred_check_branch
      %161 = sbr.rel (%p158) target = $region12
    $region11: #{basic_block_forward.5} parent=5 // pred_region
      %s162 = ssub.s32 %s10, 1
      // Predicated region
      $region13: #{basic_block_forward.5} parent=11 // pred_check
        %p163 = pneg %p99
      $region14: #{basic_block_forward.5} parent=11 // pred_check_branch
        %165 = sbr.rel (%p163) target = $region16
      $region15: #{basic_block_forward.5} parent=11 // pred_region
        _
      $region16: #{basic_block_forward.5} parent=11 // pred_fallthru
        _
      // Predicated region
      $region17: #{basic_block_forward.5} parent=11 // pred_check
        %p166 = pneg %p120
      $region18: #{basic_block_forward.5} parent=11 // pred_check_branch
        %168 = sbr.rel (%p166) target = $region20
      $region19: #{basic_block_forward.5} parent=11 // pred_region
        _
      $region20: #{basic_block_forward.5} parent=11 // pred_fallthru
        _
    $region12: #{basic_block_forward.5} parent=5 // pred_fallthru
      _
    %p169 = scmp.lt.s32.totalorder %s10, 4
    // Predicated region
    $region21: #{basic_block_forward.5} parent=5 // pred_check
      %p170 = pneg %p169
    $region22: #{basic_block_forward.5} parent=5 // pred_check_branch
      %172 = sbr.rel (%p170) target = $region24
    $region23: #{basic_block_forward.5} parent=5 // pred_region
      // Predicated region
      $region25: #{basic_block_forward.5} parent=23 // pred_check
        %p173 = pneg %p44
      $region26: #{basic_block_forward.5} parent=23 // pred_check_branch
        %175 = sbr.rel (%p173) target = $region28
      $region27: #{basic_block_forward.5} parent=23 // pred_region
        %p176 = scmp.lt.s32.totalorder %s17, 1
        %s177 = scalar_select %p176, %s17, 1
        %p178 = scmp.lt.s32.totalorder %s18, 1
        %s179 = scalar_select %p178, %s18, 1
        %s180 = smul.addr %s177, 2
        %s181 = sadd.s32 %s179, %s180
        %s182 = smul.addr %s181, 8
        %s183 = scalar_lea.vmem %s0, %s182
      $region28: #{basic_block_forward.5} parent=23 // pred_fallthru
        _
      // Predicated region
      $region29: #{basic_block_forward.5} parent=23 // pred_check
        %p184 = pneg %p72
      $region30: #{basic_block_forward.5} parent=23 // pred_check_branch
        %186 = sbr.rel (%p184) target = $region32
      $region31: #{basic_block_forward.5} parent=23 // pred_region
        %p187 = scmp.lt.s32.totalorder %s17, 1
        %s188 = scalar_select %p187, %s17, 1
        %p189 = scmp.lt.s32.totalorder %s18, 1
        %s190 = scalar_select %p189, %s18, 1
        %s191 = smul.addr %s188, 2
        %s192 = sadd.s32 %s190, %s191
        %s193 = smul.addr %s192, 8
        %s194 = scalar_lea.vmem %s1, %s193
      $region32: #{basic_block_forward.5} parent=23 // pred_fallthru
        _
    $region24: #{basic_block_forward.5} parent=5 // pred_fallthru
      _
    %p195 = scmp.le.s32.totalorder 1, %s10
    %p196 = scmp.lt.s32.totalorder %s10, 5
    %p197 = pnand %p195, %p196
    %p198 = pneg %p197
    // Predicated region
    $region33: #{basic_block_forward.5} parent=5 // pred_check
      _
    $region34: #{basic_block_forward.5} parent=5 // pred_check_branch
      %200 = sbr.rel (%p197) target = $region36
    $region35: #{basic_block_forward.5} parent=5 // pred_region
      %s201 = ssub.s32 %s10, 1
      %p202 = scmp.lt.s32.totalorder %s19, 1
      %s203 = scalar_select %p202, %s19, 1
      %p204 = scmp.lt.s32.totalorder %s20, 1
      %s205 = scalar_select %p204, %s20, 1
      %s206 = smul.addr %s203, 2
      %s207 = sadd.s32 %s205, %s206
      %s208 = smul.addr %s207, 8
      %s209 = scalar_lea.vmem %s0, %s208
      %p210 = pneg %p50
      %p211 = pneg %p47
      %p212 = scmp.lt.s32.totalorder %s19, 1
      %s213 = scalar_select %p212, %s19, 1
      %p214 = scmp.lt.s32.totalorder %s20, 1
      %s215 = scalar_select %p214, %s20, 1
      %s216 = smul.addr %s213, 2
      %s217 = sadd.s32 %s215, %s216
      %s218 = smul.addr %s217, 8
      %s219 = scalar_lea.vmem %s1, %s218
      %p220 = pneg %p78
      %p221 = pneg %p75
      %p222 = pneg %p99
      %p223 = pneg %p96
      %p224 = pneg %p120
      %p225 = pneg %p117
      %p226 = pneg %p148
      %p227 = pneg %p145
      %p228 = scmp.lt.s32.totalorder %s19, 1
      %s229 = scalar_select %p228, %s19, 1
      %p230 = scmp.lt.s32.totalorder %s20, 1
      %s231 = scalar_select %p230, %s20, 1
      %s232 = smul.addr %s229, 2
      %s233 = sadd.s32 %s231, %s232
      %s234 = smul.addr %s233, 8
      %s235 = scalar_lea.vmem %s4, %s234
      %p236 = scmp.lt.s32.totalorder %s19, 1
      %s237 = scalar_select %p236, %s19, 1
      %p238 = scmp.lt.s32.totalorder %s20, 1
      %s239 = scalar_select %p238, %s20, 1
      %s240 = smul.addr %s237, 2
      %s241 = sadd.s32 %s239, %s240
      %s242 = smul.addr %s241, 8
      %s243 = scalar_lea.vmem %s0, %s242
      %p244 = scmp.lt.s32.totalorder %s19, 1
      %s245 = scalar_select %p244, %s19, 1
      %p246 = scmp.lt.s32.totalorder %s20, 1
      %s247 = scalar_select %p246, %s20, 1
      %s248 = smul.addr %s245, 2
      %s249 = sadd.s32 %s247, %s248
      %s250 = smul.addr %s249, 8
      %s251 = scalar_lea.vmem %s1, %s250
      %p252 = scmp.lt.s32.totalorder %s19, 1
      %s253 = scalar_select %p252, %s19, 1
      %p254 = scmp.lt.s32.totalorder %s20, 1
      %s255 = scalar_select %p254, %s20, 1
      %s256 = smul.addr %s253, 2
      %s257 = sadd.s32 %s255, %s256
      %s258 = smul.addr %s257, 8
      %s259 = scalar_lea.vmem %s4, %s258
      %v260 = vld [vmem:[%s243] sm:$0xff]
      %v261 = vld [vmem:[%s251] sm:$0xff]
      %v262 = vld [vmem:[%s2] sm:$0x1]
      %v264 = vperm.slane %v262, 0
      %v266 = vmul.f32 %v260, %v264
      %v267 = vld [vmem:[%s3] sm:$0x1]
      %v269 = vperm.slane %v267, 0
      %v271 = vadd.f32 %v266, %v269
      %v272 = vadd.f32 %v271, %v261
      %v273 = vmax.f32 %v272, 0.0
      %274 = vst [vmem:[%s259] sm:$0xff] %v273
      %p275 = scmp.lt.s32.totalorder %s19, 1
      %s276 = scalar_select %p275, %s19, 1
      %p277 = scmp.lt.s32.totalorder %s20, 1
      %s278 = scalar_select %p277, %s20, 1
      %s279 = smul.addr %s276, 2
      %s280 = sadd.s32 %s278, %s279
      %s281 = smul.addr %s280, 8
      %s282 = scalar_lea.vmem %s4, %s281
      // Predicated region
      $region37: #{basic_block_forward.5} parent=35 // pred_check
        %p283 = pneg %p145
      $region38: #{basic_block_forward.5} parent=35 // pred_check_branch
        %285 = sbr.rel (%p283) target = $region40
      $region39: #{basic_block_forward.5} parent=35 // pred_region
        _
      $region40: #{basic_block_forward.5} parent=35 // pred_fallthru
        _
    $region36: #{basic_block_forward.5} parent=5 // pred_fallthru
      _
    %p286 = scmp.le.s32.totalorder 2, %s10
    // Predicated region
    $region41: #{basic_block_forward.5} parent=5 // pred_check
      %p287 = pneg %p286
    $region42: #{basic_block_forward.5} parent=5 // pred_check_branch
      %289 = sbr.rel (%p287) target = $region44
    $region43: #{basic_block_forward.5} parent=5 // pred_region
      %s290 = ssub.s32 %s10, 2
      // Predicated region
      $region45: #{basic_block_forward.5} parent=43 // pred_check
        %p291 = pneg %p151
      $region46: #{basic_block_forward.5} parent=43 // pred_check_branch
        %293 = sbr.rel (%p291) target = $region48
      $region47: #{basic_block_forward.5} parent=43 // pred_region
        %p294 = scmp.lt.s32.totalorder %s21, 1
        %s295 = scalar_select %p294, %s21, 1
        %p296 = scmp.lt.s32.totalorder %s22, 1
        %s297 = scalar_select %p296, %s22, 1
        %s298 = smul.addr %s295, 2
        %s299 = sadd.s32 %s297, %s298
        %s300 = smul.addr %s299, 8
        %s301 = scalar_lea.vmem %s4, %s300
      $region48: #{basic_block_forward.5} parent=43 // pred_fallthru
        _
    $region44: #{basic_block_forward.5} parent=5 // pred_fallthru
      _
  $region6: #{basic_block_forward.5} parent=0 // loop_footer
    %s14 = sadd.s32 1, %s10
  $region7: #{basic_block_forward.5} parent=0 // loop_footer_branch
    %9 = sbr.rel target = $region3
  $region8: #{basic_block_forward.5} parent=0 // loop_exit
    _

</llo_original>
